<compile_context>
chip_gen: v7x
topology: tpu7x:2x2x1
jax: 0.10.0
libtpu: 0.0.40
codegen_flags: <defaults>
</compile_context>

<pallas_src>
import functools

import jax
import jax.numpy as jnp
import numpy as np
from jax.experimental import pallas as pl
from jax.experimental.pallas import tpu as pltpu

NUM_ITER = 3
LANE = 128  # TPU lane width; weight feature dims are padded to this.


def _relu(v):
    return jnp.maximum(v, 0.0)


def _mmf(a, b):
    return jnp.dot(a, b, preferred_element_type=jnp.float32)


def _b16(v):
    return v.astype(jnp.bfloat16)


def _iter_gnn_kernel(num_iter,
                     x_ref, ea_ref, G_ref, S_ref, P_ref, invc_ref, M_ref,
                     Wme_ref, bm_ref, Wsa_ref, bs_ref, Wr_ref, br_ref,
                     Wc_ref, bc_ref,
                     x_out_ref, iter_ref,
                     newx_ref, xacc_ref, eapad_ref, lc_ref, state_ref):
    _, F = x_ref.shape
    _, Fe = ea_ref.shape
    Fp = newx_ref.shape[1]
    B = lc_ref.shape[0]

    # ---------- persistent state init (lane-pad x / edge_attr in VMEM) ------
    newx_ref[...] = jnp.zeros(newx_ref.shape, newx_ref.dtype)
    newx_ref[:, 0:F] = x_ref[...]               # new_x state, lane-padded
    xacc_ref[...] = newx_ref[...]               # fallback: loop never runs -> x
    eapad_ref[...] = jnp.zeros(eapad_ref.shape, eapad_ref.dtype)
    eapad_ref[:, 0:Fe] = _b16(ea_ref[...])
    lc_ref[...] = jnp.ones(lc_ref.shape, jnp.float32)   # per-graph left_conf
    iter_ref[0] = jnp.int32(0)
    state_ref[0] = jnp.int32(0)                 # broken flag
    state_ref[1] = jnp.int32(1)                 # cond for step 0 (lc == 1)

    # ---------- loop-invariant reads hoisted out of the unrolled loop -------
    G = G_ref[...]
    S = S_ref[...]
    P = P_ref[...]
    M = M_ref[...]
    invc = invc_ref[...]
    Wme = Wme_ref[...]
    bm = bm_ref[...]
    Wsa = Wsa_ref[...]
    bs = bs_ref[...]
    Wr = Wr_ref[...]
    br = br_ref[...]
    Wc = Wc_ref[...]
    bc = bc_ref[...]
    ea_b = eapad_ref[...]                        # [E, Fp] bf16, loop-invariant

    for k in range(num_iter):

        @pl.when(state_ref[0] == 0)              # not broken: loop var advances
        def _step():
            iter_ref[0] = jnp.int32(k)           # PyTorch loop-variable value
            cond_val = state_ref[1]              # snapshot before body rewrites

            @pl.when(cond_val == 1)              # max(left_confidence) > 1e-7
            def _body():
                h = newx_ref[...]                # [N, Fp] f32
                h_b = _b16(h)
                lc = lc_ref[...]                 # [B, 1]  f32

                # gnn_layer: gather -> fused edge MLP -> scatter -> fused node MLP
                x_src = _b16(_mmf(G, h_b))                           # [E, Fp]
                msg = _relu(_mmf(jnp.concatenate([x_src, ea_b], axis=1),
                                 Wme) + bm)                          # [E, Fp]
                agg = _b16(_mmf(S, _b16(msg)))                       # [N, Fp]
                new_x = _relu(_mmf(jnp.concatenate([h_b, agg], axis=1),
                                   Wsa) + bs)                        # [N, Fp]

                # readout: bf16 0/1 sum-pool, f32 mean, bf16 MLP
                g = _mmf(P, h_b) * invc                              # [B, Fp]
                gf = _relu(_mmf(_b16(g), Wr) + br)                   # [B, Fp]

                # confidence at graph granularity (B sigmoids, B-row reduce)
                conf = jax.nn.sigmoid(jnp.sum(gf * Wc, axis=1, keepdims=True)
                                      + bc)                          # [B, 1]

                # per-graph scale lc*conf mapped to nodes (lane-dense M matmul)
                sg = lc * conf                                       # [B, 1]
                scale = _mmf(M, _b16(jnp.broadcast_to(sg, (B, Fp)))) # [N, Fp]

                contrib = scale * new_x
                if k == 0:                       # direct write, no zeros + add
                    xacc_ref[...] = contrib
                else:
                    xacc_ref[...] = xacc_ref[...] + contrib
                newx_ref[...] = new_x
                lc_new = lc * (1.0 - conf)
                lc_ref[...] = lc_new
                state_ref[1] = jnp.where(jnp.max(lc_new) > 1e-7,
                                         jnp.int32(1), jnp.int32(0))

            @pl.when(cond_val == 0)              # break: freeze iter_num at k
            def _brk():
                state_ref[0] = jnp.int32(1)

    # Single narrow store of the true-F output (no host-side slice pass).
    x_out_ref[...] = xacc_ref[:, 0:F]


def _pad2(a, rows, cols, dtype):
    out = jnp.zeros((rows, cols), dtype)
    return out.at[:a.shape[0], :a.shape[1]].set(a.astype(dtype))


def iter_gnn_forward(x, edge_index, edge_attr, batch, params, num_graphs,
                     num_iter=NUM_ITER):
    N, F = x.shape
    E, Fe = edge_attr.shape
    B = int(num_graphs)
    Fp = LANE
    src, dst = edge_index[0], edge_index[1]

    # Glue: one-hot gather / scatter-add / pooling operators (exact 0/1 in bf16).
    # TODO(synk): replace dense one-hot operators with index-based access
    # (scalar-prefetched src/dst + tiled edge/node grid) beyond toy sizes.
    G = jax.nn.one_hot(src, N, dtype=jnp.bfloat16)             # [E, N] gather
    S = jax.nn.one_hot(dst, N, dtype=jnp.bfloat16).T           # [N, E] scatter
    onehot_b = jax.nn.one_hot(batch, B, dtype=jnp.float32)     # [N, B]
    counts = jnp.maximum(jnp.sum(onehot_b, axis=0), 1.0)       # [B]
    P = onehot_b.T.astype(jnp.bfloat16)                        # [B, N] sum-pool
    inv_counts = (1.0 / counts)[:, None].astype(jnp.float32)   # [B, 1] f32 mean
    M = onehot_b.astype(jnp.bfloat16)                          # [N, B] graph->node

    # K-fused, 128-lane-padded bf16 weights (activations cast to bf16 in-kernel,
    # accumulation in f32).  Biases / Wc stay f32 (VPU adds / lane reduction).
    Wme = jnp.concatenate([_pad2(params["Wm"], Fp, Fp, jnp.bfloat16),
                           _pad2(params["We"], Fp, Fp, jnp.bfloat16)], axis=0)
    Wsa = jnp.concatenate([_pad2(params["Ws"], Fp, Fp, jnp.bfloat16),
                           _pad2(params["Wa"], Fp, Fp, jnp.bfloat16)], axis=0)
    Wr = _pad2(params["Wr"], Fp, Fp, jnp.bfloat16)
    bm = _pad2(params["bm"], 1, Fp, jnp.float32)
    bs = _pad2(params["bs"], 1, Fp, jnp.float32)
    br = _pad2(params["br"], 1, Fp, jnp.float32)
    Wc = _pad2(params["Wc"], 1, Fp, jnp.float32)
    bc = params["bc"].astype(jnp.float32)                      # [1, 1]

    # x / edge_attr / x_out stay at true feature width in HBM (no host padding).
    operands = (x.astype(jnp.float32), edge_attr.astype(jnp.float32),
                G, S, P, inv_counts, M, Wme, bm, Wsa, bs, Wr, br, Wc, bc)

    flops_iter = (2 * E * N * Fp             # one-hot gather
                  + 2 * E * (2 * Fp) * Fp    # fused edge MLP (K = 2*Fp)
                  + 2 * N * E * Fp           # one-hot scatter-add
                  + 2 * N * (2 * Fp) * Fp    # fused node MLP (K = 2*Fp)
                  + 2 * B * N * Fp           # sum-pool
                  + 2 * B * Fp * Fp          # readout MLP
                  + 2 * N * B * Fp           # graph->node scale map
                  + 6 * N * Fp + 4 * B * Fp) # elementwise
    bytes_accessed = int(sum(int(np.prod(a.shape)) * a.dtype.itemsize
                             for a in operands) + N * F * 4 + 4)

    vmem = pl.BlockSpec(memory_space=pltpu.MemorySpace.VMEM)
    smem = pl.BlockSpec(memory_space=pltpu.MemorySpace.SMEM)
    kernel = functools.partial(_iter_gnn_kernel, num_iter)

    # TODO(synk): beyond toy sizes add a node/edge-tiled grid with a "parallel"
    # dimension (v7x has 2 TensorCores) and re-derive tiles against v7x's
    # 64 MiB VMEM; this toy problem fits a single grid point comfortably.
    x_out, iter_out = pl.pallas_call(
        kernel,
        out_shape=[
            jax.ShapeDtypeStruct((N, F), jnp.float32),
            jax.ShapeDtypeStruct((1,), jnp.int32),
        ],
        in_specs=[vmem] * len(operands),
        out_specs=[vmem, smem],
        scratch_shapes=[
            pltpu.VMEM((N, Fp), jnp.float32),   # new_x state (lane-padded)
            pltpu.VMEM((N, Fp), jnp.float32),   # accumulated x (lane-padded)
            pltpu.VMEM((E, Fp), jnp.bfloat16),  # lane-padded edge_attr
            pltpu.VMEM((B, 1), jnp.float32),    # per-graph left_confidence
            pltpu.SMEM((2,), jnp.int32),        # [broken, cond-for-next-step]
        ],
        compiler_params=pltpu.CompilerParams(
            vmem_limit_bytes=32 * 1024 * 1024),
        cost_estimate=pl.CostEstimate(
            flops=num_iter * flops_iter,
            transcendentals=num_iter * B,
            bytes_accessed=bytes_accessed),
    )(*operands)

    return x_out, iter_out[0]


def iter_gnn_reference(x, edge_index, edge_attr, batch, params, num_graphs,
                       num_iter=NUM_ITER):
    """Pure-JAX f32 reference matching the PyTorch forward semantics."""
    N, F = x.shape
    B = int(num_graphs)
    src, dst = edge_index[0], edge_index[1]

    def gnn_layer(h):
        msg = jax.nn.relu(h[src] @ params["Wm"] + edge_attr @ params["We"]
                          + params["bm"])
        agg = jax.ops.segment_sum(msg, dst, num_segments=N)
        return jax.nn.relu(h @ params["Ws"] + agg @ params["Wa"] + params["bs"])

    def readout(h):
        sums = jax.ops.segment_sum(h, batch, num_segments=B)
        cnts = jnp.maximum(jax.ops.segment_sum(jnp.ones((N,)), batch,
                                               num_segments=B), 1.0)
        g = sums / cnts[:, None]
        return jax.nn.relu(g @ params["Wr"] + params["br"])

    def confidence(gf):
        return jax.nn.sigmoid(jnp.sum(gf * params["Wc"], axis=1, keepdims=True)
                              + params["bc"])

    new_x = x
    left_conf = jnp.ones((N, 1), jnp.float32)
    iter_num = 0
    for k in range(num_iter):
        if float(jnp.max(left_conf)) > 1e-7:
            iter_num = k
            h_in = new_x
            new_x = gnn_layer(h_in)
            gf = readout(h_in)
            cur_conf = confidence(gf)[batch]            # [N, 1]
            x_base = jnp.zeros_like(x) if k == 0 else x
            x = x_base + left_conf * cur_conf * new_x
            left_conf = left_conf * (1.0 - cur_conf)
        else:
            iter_num = k
            break
    return x, iter_num


def make_params(key, F, Fe):
    ks = jax.random.split(key, 10)
    s = 0.3
    return {
        "Wm": s * jax.random.normal(ks[0], (F, F), jnp.float32),
        "We": s * jax.random.normal(ks[1], (Fe, F), jnp.float32),
        "bm": 0.1 * jax.random.normal(ks[2], (1, F), jnp.float32),
        "Ws": s * jax.random.normal(ks[3], (F, F), jnp.float32),
        "Wa": s * jax.random.normal(ks[4], (F, F), jnp.float32),
        "bs": 0.1 * jax.random.normal(ks[5], (1, F), jnp.float32),
        "Wr": s * jax.random.normal(ks[6], (F, F), jnp.float32),
        "br": 0.1 * jax.random.normal(ks[7], (1, F), jnp.float32),
        "Wc": s * jax.random.normal(ks[8], (1, F), jnp.float32),
        "bc": 0.1 * jax.random.normal(ks[9], (1, 1), jnp.float32),
    }


if __name__ == "__main__":
    N, F, E, Fe, B = 16, 8, 32, 4, 2

    key = jax.random.PRNGKey(0)
    k_x, k_ei, k_ea, k_p = jax.random.split(key, 4)

    x = jax.random.normal(k_x, (N, F), jnp.float32)
    edge_index = jax.random.randint(k_ei, (2, E), 0, N, dtype=jnp.int32)
    edge_attr = jax.random.normal(k_ea, (E, Fe), jnp.float32)
    batch = jnp.repeat(jnp.arange(B, dtype=jnp.int32), N // B)
    params = make_params(k_p, F, Fe)

    x_out, iter_num = iter_gnn_forward(x, edge_index, edge_attr, batch,
                                       params, num_graphs=B)
    jax.block_until_ready(x_out)

    x_expect, iter_expect = iter_gnn_reference(x, edge_index, edge_attr, batch,
                                               params, num_graphs=B)
    # Per the perf review, weight matmuls now run bf16 x bf16 (f32 accumulate)
    # and the one-hot gather/scatter/pool operators are bf16; tolerance covers
    # the resulting rounding vs. the pure-f32 reference.
    np.testing.assert_allclose(np.asarray(x_out), np.asarray(x_expect),
                               rtol=3e-2, atol=3e-2)
    assert int(iter_num) == int(iter_expect)

    print("KERNEL_OK")
</pallas_src>

<mosaic_0001>
module attributes {stable_mosaic.version = 11 : i64} {
  func.func @_iter_gnn_kernel(%arg0: memref<16x8xf32, #tpu.memory_space<vmem>>, %arg1: memref<32x4xf32, #tpu.memory_space<vmem>>, %arg2: memref<32x16xbf16, #tpu.memory_space<vmem>>, %arg3: memref<16x32xbf16, #tpu.memory_space<vmem>>, %arg4: memref<2x16xbf16, #tpu.memory_space<vmem>>, %arg5: memref<2x1xf32, #tpu.memory_space<vmem>>, %arg6: memref<16x2xbf16, #tpu.memory_space<vmem>>, %arg7: memref<256x128xbf16, #tpu.memory_space<vmem>>, %arg8: memref<1x128xf32, #tpu.memory_space<vmem>>, %arg9: memref<256x128xbf16, #tpu.memory_space<vmem>>, %arg10: memref<1x128xf32, #tpu.memory_space<vmem>>, %arg11: memref<128x128xbf16, #tpu.memory_space<vmem>>, %arg12: memref<1x128xf32, #tpu.memory_space<vmem>>, %arg13: memref<1x128xf32, #tpu.memory_space<vmem>>, %arg14: memref<1x1xf32, #tpu.memory_space<vmem>>, %arg15: memref<16x8xf32, #tpu.memory_space<vmem>>, %arg16: memref<1xi32, #tpu.memory_space<smem>>, %arg17: memref<16x128xf32, #tpu.memory_space<vmem>>, %arg18: memref<16x128xf32, #tpu.memory_space<vmem>>, %arg19: memref<32x128xbf16, #tpu.memory_space<vmem>>, %arg20: memref<2x1xf32, #tpu.memory_space<vmem>>, %arg21: memref<2xi32, #tpu.memory_space<smem>>) attributes {dimension_semantics = [], scalar_prefetch = 0 : i64, scratch_operands = 5 : i64, tpu.core_type = #tpu.core_type<tc>} {
    %cst = arith.constant 0.000000e+00 : f32
    %0 = vector.broadcast %cst : f32 to vector<16x128xf32>
    %c0 = arith.constant 0 : index
    %c0_0 = arith.constant 0 : index
    %1 = vector.load %arg17[%c0, %c0_0] : memref<16x128xf32, #tpu.memory_space<vmem>>, vector<16x128xf32>
    tpu.vector_store %arg17[%c0, %c0_0], %0 {strides = array<i32>} : memref<16x128xf32, #tpu.memory_space<vmem>>, vector<16x128xf32>,
    %c0_1 = arith.constant 0 : index
    %c0_2 = arith.constant 0 : index
    %2 = vector.load %arg0[%c0_1, %c0_2] : memref<16x8xf32, #tpu.memory_space<vmem>>, vector<16x8xf32>
    %c0_3 = arith.constant 0 : index
    %c0_4 = arith.constant 0 : index
    %3 = vector.load %arg17[%c0_3, %c0_4] : memref<16x128xf32, #tpu.memory_space<vmem>>, vector<16x8xf32>
    tpu.vector_store %arg17[%c0_3, %c0_4], %2 {strides = array<i32>} : memref<16x128xf32, #tpu.memory_space<vmem>>, vector<16x8xf32>,
    %c0_5 = arith.constant 0 : index
    %c0_6 = arith.constant 0 : index
    %4 = vector.load %arg17[%c0_5, %c0_6] : memref<16x128xf32, #tpu.memory_space<vmem>>, vector<16x128xf32>
    %c0_7 = arith.constant 0 : index
    %c0_8 = arith.constant 0 : index
    %5 = vector.load %arg18[%c0_7, %c0_8] : memref<16x128xf32, #tpu.memory_space<vmem>>, vector<16x128xf32>
    tpu.vector_store %arg18[%c0_7, %c0_8], %4 {strides = array<i32>} : memref<16x128xf32, #tpu.memory_space<vmem>>, vector<16x128xf32>,
    %cst_9 = arith.constant 0.000000e+00 : bf16
    %6 = vector.broadcast %cst_9 : bf16 to vector<32x128xbf16>
    %c0_10 = arith.constant 0 : index
    %c0_11 = arith.constant 0 : index
    %7 = vector.load %arg19[%c0_10, %c0_11] : memref<32x128xbf16, #tpu.memory_space<vmem>>, vector<32x128xbf16>
    tpu.vector_store %arg19[%c0_10, %c0_11], %6 {strides = array<i32>} : memref<32x128xbf16, #tpu.memory_space<vmem>>, vector<32x128xbf16>,
    %c0_12 = arith.constant 0 : index
    %c0_13 = arith.constant 0 : index
    %8 = vector.load %arg1[%c0_12, %c0_13] : memref<32x4xf32, #tpu.memory_space<vmem>>, vector<32x4xf32>
    %9 = arith.truncf %8 : vector<32x4xf32> to vector<32x4xbf16>
    %c0_14 = arith.constant 0 : index
    %c0_15 = arith.constant 0 : index
    %10 = vector.load %arg19[%c0_14, %c0_15] : memref<32x128xbf16, #tpu.memory_space<vmem>>, vector<32x4xbf16>
    tpu.vector_store %arg19[%c0_14, %c0_15], %9 {strides = array<i32>} : memref<32x128xbf16, #tpu.memory_space<vmem>>, vector<32x4xbf16>,
    %cst_16 = arith.constant 1.000000e+00 : f32
    %11 = vector.broadcast %cst_16 : f32 to vector<2x1xf32>
    %c0_17 = arith.constant 0 : index
    %c0_18 = arith.constant 0 : index
    %12 = vector.load %arg20[%c0_17, %c0_18] : memref<2x1xf32, #tpu.memory_space<vmem>>, vector<2x1xf32>
    tpu.vector_store %arg20[%c0_17, %c0_18], %11 {strides = array<i32>} : memref<2x1xf32, #tpu.memory_space<vmem>>, vector<2x1xf32>,
    %c0_i32 = arith.constant 0 : i32
    %c0_19 = arith.constant 0 : index
    %13 = memref.load %arg16[%c0_19] : memref<1xi32, #tpu.memory_space<smem>>
    memref.store %c0_i32, %arg16[%c0_19] : memref<1xi32, #tpu.memory_space<smem>>
    %c0_i32_20 = arith.constant 0 : i32
    %c0_21 = arith.constant 0 : index
    %14 = memref.load %arg21[%c0_21] : memref<2xi32, #tpu.memory_space<smem>>
    memref.store %c0_i32_20, %arg21[%c0_21] : memref<2xi32, #tpu.memory_space<smem>>
    %c1_i32 = arith.constant 1 : i32
    %c1 = arith.constant 1 : index
    %15 = memref.load %arg21[%c1] : memref<2xi32, #tpu.memory_space<smem>>
    memref.store %c1_i32, %arg21[%c1] : memref<2xi32, #tpu.memory_space<smem>>
    %c0_22 = arith.constant 0 : index
    %c0_23 = arith.constant 0 : index
    %16 = vector.load %arg2[%c0_22, %c0_23] : memref<32x16xbf16, #tpu.memory_space<vmem>>, vector<32x16xbf16>
    %c0_24 = arith.constant 0 : index
    %c0_25 = arith.constant 0 : index
    %17 = vector.load %arg3[%c0_24, %c0_25] : memref<16x32xbf16, #tpu.memory_space<vmem>>, vector<16x32xbf16>
    %c0_26 = arith.constant 0 : index
    %c0_27 = arith.constant 0 : index
    %18 = vector.load %arg4[%c0_26, %c0_27] : memref<2x16xbf16, #tpu.memory_space<vmem>>, vector<2x16xbf16>
    %c0_28 = arith.constant 0 : index
    %c0_29 = arith.constant 0 : index
    %19 = vector.load %arg6[%c0_28, %c0_29] : memref<16x2xbf16, #tpu.memory_space<vmem>>, vector<16x2xbf16>
    %c0_30 = arith.constant 0 : index
    %c0_31 = arith.constant 0 : index
    %20 = vector.load %arg5[%c0_30, %c0_31] : memref<2x1xf32, #tpu.memory_space<vmem>>, vector<2x1xf32>
    %c0_32 = arith.constant 0 : index
    %c0_33 = arith.constant 0 : index
    %21 = vector.load %arg7[%c0_32, %c0_33] : memref<256x128xbf16, #tpu.memory_space<vmem>>, vector<256x128xbf16>
    %c0_34 = arith.constant 0 : index
    %c0_35 = arith.constant 0 : index
    %22 = vector.load %arg8[%c0_34, %c0_35] : memref<1x128xf32, #tpu.memory_space<vmem>>, vector<1x128xf32>
    %c0_36 = arith.constant 0 : index
    %c0_37 = arith.constant 0 : index
    %23 = vector.load %arg9[%c0_36, %c0_37] : memref<256x128xbf16, #tpu.memory_space<vmem>>, vector<256x128xbf16>
    %c0_38 = arith.constant 0 : index
    %c0_39 = arith.constant 0 : index
    %24 = vector.load %arg10[%c0_38, %c0_39] : memref<1x128xf32, #tpu.memory_space<vmem>>, vector<1x128xf32>
    %c0_40 = arith.constant 0 : index
    %c0_41 = arith.constant 0 : index
    %25 = vector.load %arg11[%c0_40, %c0_41] : memref<128x128xbf16, #tpu.memory_space<vmem>>, vector<128x128xbf16>
    %c0_42 = arith.constant 0 : index
    %c0_43 = arith.constant 0 : index
    %26 = vector.load %arg12[%c0_42, %c0_43] : memref<1x128xf32, #tpu.memory_space<vmem>>, vector<1x128xf32>
    %c0_44 = arith.constant 0 : index
    %c0_45 = arith.constant 0 : index
    %27 = vector.load %arg13[%c0_44, %c0_45] : memref<1x128xf32, #tpu.memory_space<vmem>>, vector<1x128xf32>
    %c0_46 = arith.constant 0 : index
    %c0_47 = arith.constant 0 : index
    %28 = vector.load %arg14[%c0_46, %c0_47] : memref<1x1xf32, #tpu.memory_space<vmem>>, vector<1x1xf32>
    %c0_48 = arith.constant 0 : index
    %c0_49 = arith.constant 0 : index
    %29 = vector.load %arg19[%c0_48, %c0_49] : memref<32x128xbf16, #tpu.memory_space<vmem>>, vector<32x128xbf16>
    %c0_50 = arith.constant 0 : index
    %30 = memref.load %arg21[%c0_50] : memref<2xi32, #tpu.memory_space<smem>>
    %c0_i32_51 = arith.constant 0 : i32
    %31 = arith.cmpi eq, %30, %c0_i32_51 : i32
    %32 = arith.extui %31 : i1 to i32
    %c0_i32_52 = arith.constant 0 : i32
    %33 = arith.cmpi ne, %32, %c0_i32_52 : i32
    scf.if %33 {
      %c0_i32_63 = arith.constant 0 : i32
      %c0_64 = arith.constant 0 : index
      %44 = memref.load %arg16[%c0_64] : memref<1xi32, #tpu.memory_space<smem>>
      memref.store %c0_i32_63, %arg16[%c0_64] : memref<1xi32, #tpu.memory_space<smem>>
      %c1_65 = arith.constant 1 : index
      %45 = memref.load %arg21[%c1_65] : memref<2xi32, #tpu.memory_space<smem>>
      %c1_i32_66 = arith.constant 1 : i32
      %46 = arith.cmpi eq, %45, %c1_i32_66 : i32
      %47 = arith.extui %46 : i1 to i32
      %c0_i32_67 = arith.constant 0 : i32
      %48 = arith.cmpi ne, %47, %c0_i32_67 : i32
      scf.if %48 {
        %c0_70 = arith.constant 0 : index
        %c0_71 = arith.constant 0 : index
        %52 = vector.load %arg17[%c0_70, %c0_71] : memref<16x128xf32, #tpu.memory_space<vmem>>, vector<16x128xf32>
        %53 = arith.truncf %52 : vector<16x128xf32> to vector<16x128xbf16>
        %c0_72 = arith.constant 0 : index
        %c0_73 = arith.constant 0 : index
        %54 = vector.load %arg20[%c0_72, %c0_73] : memref<2x1xf32, #tpu.memory_space<vmem>>, vector<2x1xf32>
        %cst_74 = arith.constant dense<0.000000e+00> : vector<32x128xf32>
        %55 = tpu.matmul %16, %53, %cst_74 {dimension_numbers = #tpu.dot_dimension_numbers<[1], [0], [0], [1], [0, 0, 1, 1], [], []>} : vector<32x16xbf16>, vector<16x128xbf16>, vector<32x128xf32> -> vector<32x128xf32>
        %56 = arith.truncf %55 : vector<32x128xf32> to vector<32x128xbf16>
        %57 = tpu.concatenate %56, %29 in 1 : vector<32x128xbf16>, vector<32x128xbf16> -> vector<32x256xbf16>
        %cst_75 = arith.constant dense<0.000000e+00> : vector<32x128xf32>
        %58 = tpu.matmul %57, %21, %cst_75 {dimension_numbers = #tpu.dot_dimension_numbers<[1], [0], [0], [1], [0, 0, 1, 1], [], []>} : vector<32x256xbf16>, vector<256x128xbf16>, vector<32x128xf32> -> vector<32x128xf32>
        %59 = vector.broadcast %22 : vector<1x128xf32> to vector<32x128xf32>
        %60 = arith.addf %58, %59 : vector<32x128xf32>
        %cst_76 = arith.constant 0.000000e+00 : f32
        %61 = vector.broadcast %cst_76 : f32 to vector<32x128xf32>
        %62 = arith.maximumf %60, %61 : vector<32x128xf32>
        %63 = arith.truncf %62 : vector<32x128xf32> to vector<32x128xbf16>
        %cst_77 = arith.constant dense<0.000000e+00> : vector<16x128xf32>
        %64 = tpu.matmul %17, %63, %cst_77 {dimension_numbers = #tpu.dot_dimension_numbers<[1], [0], [0], [1], [0, 0, 1, 1], [], []>} : vector<16x32xbf16>, vector<32x128xbf16>, vector<16x128xf32> -> vector<16x128xf32>
        %65 = arith.truncf %64 : vector<16x128xf32> to vector<16x128xbf16>
        %66 = tpu.concatenate %53, %65 in 1 : vector<16x128xbf16>, vector<16x128xbf16> -> vector<16x256xbf16>
        %cst_78 = arith.constant dense<0.000000e+00> : vector<16x128xf32>
        %67 = tpu.matmul %66, %23, %cst_78 {dimension_numbers = #tpu.dot_dimension_numbers<[1], [0], [0], [1], [0, 0, 1, 1], [], []>} : vector<16x256xbf16>, vector<256x128xbf16>, vector<16x128xf32> -> vector<16x128xf32>
        %68 = vector.broadcast %24 : vector<1x128xf32> to vector<16x128xf32>
        %69 = arith.addf %67, %68 : vector<16x128xf32>
        %cst_79 = arith.constant 0.000000e+00 : f32
        %70 = vector.broadcast %cst_79 : f32 to vector<16x128xf32>
        %71 = arith.maximumf %69, %70 : vector<16x128xf32>
        %cst_80 = arith.constant dense<0.000000e+00> : vector<2x128xf32>
        %72 = tpu.matmul %18, %53, %cst_80 {dimension_numbers = #tpu.dot_dimension_numbers<[1], [0], [0], [1], [0, 0, 1, 1], [], []>} : vector<2x16xbf16>, vector<16x128xbf16>, vector<2x128xf32> -> vector<2x128xf32>
        %73 = vector.broadcast %20 : vector<2x1xf32> to vector<2x128xf32>
        %74 = arith.mulf %72, %73 : vector<2x128xf32>
        %75 = arith.truncf %74 : vector<2x128xf32> to vector<2x128xbf16>
        %cst_81 = arith.constant dense<0.000000e+00> : vector<2x128xf32>
        %76 = tpu.matmul %75, %25, %cst_81 {dimension_numbers = #tpu.dot_dimension_numbers<[1], [0], [0], [1], [0, 0, 1, 1], [], []>} : vector<2x128xbf16>, vector<128x128xbf16>, vector<2x128xf32> -> vector<2x128xf32>
        %77 = vector.broadcast %26 : vector<1x128xf32> to vector<2x128xf32>
        %78 = arith.addf %76, %77 : vector<2x128xf32>
        %cst_82 = arith.constant 0.000000e+00 : f32
        %79 = vector.broadcast %cst_82 : f32 to vector<2x128xf32>
        %80 = arith.maximumf %78, %79 : vector<2x128xf32>
        %81 = vector.broadcast %27 : vector<1x128xf32> to vector<2x128xf32>
        %82 = arith.mulf %80, %81 : vector<2x128xf32>
        %cst_83 = arith.constant dense<0.000000e+00> : vector<2xf32>
        %83 = vector.multi_reduction <add>, %82, %cst_83 [1] : vector<2x128xf32> to vector<2xf32>
        %84 = vector.shape_cast %83 : vector<2xf32> to vector<2x1xf32>
        %85 = vector.broadcast %28 : vector<1x1xf32> to vector<2x1xf32>
        %86 = arith.addf %84, %85 : vector<2x1xf32>
        %87 = arith.negf %86 : vector<2x1xf32>
        %88 = math.exp %87 : vector<2x1xf32>
        %cst_84 = arith.constant 1.000000e+00 : f32
        %89 = vector.broadcast %cst_84 : f32 to vector<2x1xf32>
        %90 = arith.addf %89, %88 : vector<2x1xf32>
        %91 = arith.divf %89, %90 : vector<2x1xf32>
        %92 = arith.mulf %54, %91 : vector<2x1xf32>
        %93 = vector.shape_cast %92 : vector<2x1xf32> to vector<2x1xf32>
        %94 = vector.broadcast %93 : vector<2x1xf32> to vector<2x128xf32>
        %95 = arith.truncf %94 : vector<2x128xf32> to vector<2x128xbf16>
        %cst_85 = arith.constant dense<0.000000e+00> : vector<16x128xf32>
        %96 = tpu.matmul %19, %95, %cst_85 {dimension_numbers = #tpu.dot_dimension_numbers<[1], [0], [0], [1], [0, 0, 1, 1], [], []>} : vector<16x2xbf16>, vector<2x128xbf16>, vector<16x128xf32> -> vector<16x128xf32>
        %97 = arith.mulf %96, %71 : vector<16x128xf32>
        %c0_86 = arith.constant 0 : index
        %c0_87 = arith.constant 0 : index
        %98 = vector.load %arg18[%c0_86, %c0_87] : memref<16x128xf32, #tpu.memory_space<vmem>>, vector<16x128xf32>
        tpu.vector_store %arg18[%c0_86, %c0_87], %97 {strides = array<i32>} : memref<16x128xf32, #tpu.memory_space<vmem>>, vector<16x128xf32>,
        %c0_88 = arith.constant 0 : index
        %c0_89 = arith.constant 0 : index
        %99 = vector.load %arg17[%c0_88, %c0_89] : memref<16x128xf32, #tpu.memory_space<vmem>>, vector<16x128xf32>
        tpu.vector_store %arg17[%c0_88, %c0_89], %71 {strides = array<i32>} : memref<16x128xf32, #tpu.memory_space<vmem>>, vector<16x128xf32>,
        %cst_90 = arith.constant 1.000000e+00 : f32
        %100 = vector.broadcast %cst_90 : f32 to vector<2x1xf32>
        %101 = arith.subf %100, %91 : vector<2x1xf32>
        %102 = arith.mulf %54, %101 : vector<2x1xf32>
        %c0_91 = arith.constant 0 : index
        %c0_92 = arith.constant 0 : index
        %103 = vector.load %arg20[%c0_91, %c0_92] : memref<2x1xf32, #tpu.memory_space<vmem>>, vector<2x1xf32>
        tpu.vector_store %arg20[%c0_91, %c0_92], %102 {strides = array<i32>} : memref<2x1xf32, #tpu.memory_space<vmem>>, vector<2x1xf32>,
        %104 = vector.shape_cast %102 : vector<2x1xf32> to vector<1x2x1xf32>
        %cst_93 = arith.constant dense<0xFF800000> : vector<1xf32>
        %105 = vector.multi_reduction <maximumf>, %104, %cst_93 [1, 2] : vector<1x2x1xf32> to vector<1xf32>
        %106 = vector.shape_cast %105 : vector<1xf32> to vector<1x1x1xf32>
        %107 = vector.extract %106[0, 0, 0] : f32 from vector<1x1x1xf32>
        %cst_94 = arith.constant 1.000000e-07 : f32
        %108 = arith.cmpf ogt, %107, %cst_94 : f32
        %c1_i32_95 = arith.constant 1 : i32
        %c0_i32_96 = arith.constant 0 : i32
        %109 = arith.select %108, %c1_i32_95, %c0_i32_96 : i32
        %c1_97 = arith.constant 1 : index
        %110 = memref.load %arg21[%c1_97] : memref<2xi32, #tpu.memory_space<smem>>
        memref.store %109, %arg21[%c1_97] : memref<2xi32, #tpu.memory_space<smem>>
      } else {
      }
      %c0_i32_68 = arith.constant 0 : i32
      %49 = arith.cmpi eq, %45, %c0_i32_68 : i32
      %50 = arith.extui %49 : i1 to i32
      %c0_i32_69 = arith.constant 0 : i32
      %51 = arith.cmpi ne, %50, %c0_i32_69 : i32
      scf.if %51 {
        %c1_i32_70 = arith.constant 1 : i32
        %c0_71 = arith.constant 0 : index
        %52 = memref.load %arg21[%c0_71] : memref<2xi32, #tpu.memory_space<smem>>
        memref.store %c1_i32_70, %arg21[%c0_71] : memref<2xi32, #tpu.memory_space<smem>>
      } else {
      }
    } else {
    }
    %c0_53 = arith.constant 0 : index
    %34 = memref.load %arg21[%c0_53] : memref<2xi32, #tpu.memory_space<smem>>
    %c0_i32_54 = arith.constant 0 : i32
    %35 = arith.cmpi eq, %34, %c0_i32_54 : i32
    %36 = arith.extui %35 : i1 to i32
    %c0_i32_55 = arith.constant 0 : i32
    %37 = arith.cmpi ne, %36, %c0_i32_55 : i32
    scf.if %37 {
      %c1_i32_63 = arith.constant 1 : i32
      %c0_64 = arith.constant 0 : index
      %44 = memref.load %arg16[%c0_64] : memref<1xi32, #tpu.memory_space<smem>>
      memref.store %c1_i32_63, %arg16[%c0_64] : memref<1xi32, #tpu.memory_space<smem>>
      %c1_65 = arith.constant 1 : index
      %45 = memref.load %arg21[%c1_65] : memref<2xi32, #tpu.memory_space<smem>>
      %c1_i32_66 = arith.constant 1 : i32
      %46 = arith.cmpi eq, %45, %c1_i32_66 : i32
      %47 = arith.extui %46 : i1 to i32
      %c0_i32_67 = arith.constant 0 : i32
      %48 = arith.cmpi ne, %47, %c0_i32_67 : i32
      scf.if %48 {
        %c0_70 = arith.constant 0 : index
        %c0_71 = arith.constant 0 : index
        %52 = vector.load %arg17[%c0_70, %c0_71] : memref<16x128xf32, #tpu.memory_space<vmem>>, vector<16x128xf32>
        %53 = arith.truncf %52 : vector<16x128xf32> to vector<16x128xbf16>
        %c0_72 = arith.constant 0 : index
        %c0_73 = arith.constant 0 : index
        %54 = vector.load %arg20[%c0_72, %c0_73] : memref<2x1xf32, #tpu.memory_space<vmem>>, vector<2x1xf32>
        %cst_74 = arith.constant dense<0.000000e+00> : vector<32x128xf32>
        %55 = tpu.matmul %16, %53, %cst_74 {dimension_numbers = #tpu.dot_dimension_numbers<[1], [0], [0], [1], [0, 0, 1, 1], [], []>} : vector<32x16xbf16>, vector<16x128xbf16>, vector<32x128xf32> -> vector<32x128xf32>
        %56 = arith.truncf %55 : vector<32x128xf32> to vector<32x128xbf16>
        %57 = tpu.concatenate %56, %29 in 1 : vector<32x128xbf16>, vector<32x128xbf16> -> vector<32x256xbf16>
        %cst_75 = arith.constant dense<0.000000e+00> : vector<32x128xf32>
        %58 = tpu.matmul %57, %21, %cst_75 {dimension_numbers = #tpu.dot_dimension_numbers<[1], [0], [0], [1], [0, 0, 1, 1], [], []>} : vector<32x256xbf16>, vector<256x128xbf16>, vector<32x128xf32> -> vector<32x128xf32>
        %59 = vector.broadcast %22 : vector<1x128xf32> to vector<32x128xf32>
        %60 = arith.addf %58, %59 : vector<32x128xf32>
        %cst_76 = arith.constant 0.000000e+00 : f32
        %61 = vector.broadcast %cst_76 : f32 to vector<32x128xf32>
        %62 = arith.maximumf %60, %61 : vector<32x128xf32>
        %63 = arith.truncf %62 : vector<32x128xf32> to vector<32x128xbf16>
        %cst_77 = arith.constant dense<0.000000e+00> : vector<16x128xf32>
        %64 = tpu.matmul %17, %63, %cst_77 {dimension_numbers = #tpu.dot_dimension_numbers<[1], [0], [0], [1], [0, 0, 1, 1], [], []>} : vector<16x32xbf16>, vector<32x128xbf16>, vector<16x128xf32> -> vector<16x128xf32>
        %65 = arith.truncf %64 : vector<16x128xf32> to vector<16x128xbf16>
        %66 = tpu.concatenate %53, %65 in 1 : vector<16x128xbf16>, vector<16x128xbf16> -> vector<16x256xbf16>
        %cst_78 = arith.constant dense<0.000000e+00> : vector<16x128xf32>
        %67 = tpu.matmul %66, %23, %cst_78 {dimension_numbers = #tpu.dot_dimension_numbers<[1], [0], [0], [1], [0, 0, 1, 1], [], []>} : vector<16x256xbf16>, vector<256x128xbf16>, vector<16x128xf32> -> vector<16x128xf32>
        %68 = vector.broadcast %24 : vector<1x128xf32> to vector<16x128xf32>
        %69 = arith.addf %67, %68 : vector<16x128xf32>
        %cst_79 = arith.constant 0.000000e+00 : f32
        %70 = vector.broadcast %cst_79 : f32 to vector<16x128xf32>
        %71 = arith.maximumf %69, %70 : vector<16x128xf32>
        %cst_80 = arith.constant dense<0.000000e+00> : vector<2x128xf32>
        %72 = tpu.matmul %18, %53, %cst_80 {dimension_numbers = #tpu.dot_dimension_numbers<[1], [0], [0], [1], [0, 0, 1, 1], [], []>} : vector<2x16xbf16>, vector<16x128xbf16>, vector<2x128xf32> -> vector<2x128xf32>
        %73 = vector.broadcast %20 : vector<2x1xf32> to vector<2x128xf32>
        %74 = arith.mulf %72, %73 : vector<2x128xf32>
        %75 = arith.truncf %74 : vector<2x128xf32> to vector<2x128xbf16>
        %cst_81 = arith.constant dense<0.000000e+00> : vector<2x128xf32>
        %76 = tpu.matmul %75, %25, %cst_81 {dimension_numbers = #tpu.dot_dimension_numbers<[1], [0], [0], [1], [0, 0, 1, 1], [], []>} : vector<2x128xbf16>, vector<128x128xbf16>, vector<2x128xf32> -> vector<2x128xf32>
        %77 = vector.broadcast %26 : vector<1x128xf32> to vector<2x128xf32>
        %78 = arith.addf %76, %77 : vector<2x128xf32>
        %cst_82 = arith.constant 0.000000e+00 : f32
        %79 = vector.broadcast %cst_82 : f32 to vector<2x128xf32>
        %80 = arith.maximumf %78, %79 : vector<2x128xf32>
        %81 = vector.broadcast %27 : vector<1x128xf32> to vector<2x128xf32>
        %82 = arith.mulf %80, %81 : vector<2x128xf32>
        %cst_83 = arith.constant dense<0.000000e+00> : vector<2xf32>
        %83 = vector.multi_reduction <add>, %82, %cst_83 [1] : vector<2x128xf32> to vector<2xf32>
        %84 = vector.shape_cast %83 : vector<2xf32> to vector<2x1xf32>
        %85 = vector.broadcast %28 : vector<1x1xf32> to vector<2x1xf32>
        %86 = arith.addf %84, %85 : vector<2x1xf32>
        %87 = arith.negf %86 : vector<2x1xf32>
        %88 = math.exp %87 : vector<2x1xf32>
        %cst_84 = arith.constant 1.000000e+00 : f32
        %89 = vector.broadcast %cst_84 : f32 to vector<2x1xf32>
        %90 = arith.addf %89, %88 : vector<2x1xf32>
        %91 = arith.divf %89, %90 : vector<2x1xf32>
        %92 = arith.mulf %54, %91 : vector<2x1xf32>
        %93 = vector.shape_cast %92 : vector<2x1xf32> to vector<2x1xf32>
        %94 = vector.broadcast %93 : vector<2x1xf32> to vector<2x128xf32>
        %95 = arith.truncf %94 : vector<2x128xf32> to vector<2x128xbf16>
        %cst_85 = arith.constant dense<0.000000e+00> : vector<16x128xf32>
        %96 = tpu.matmul %19, %95, %cst_85 {dimension_numbers = #tpu.dot_dimension_numbers<[1], [0], [0], [1], [0, 0, 1, 1], [], []>} : vector<16x2xbf16>, vector<2x128xbf16>, vector<16x128xf32> -> vector<16x128xf32>
        %97 = arith.mulf %96, %71 : vector<16x128xf32>
        %c0_86 = arith.constant 0 : index
        %c0_87 = arith.constant 0 : index
        %98 = vector.load %arg18[%c0_86, %c0_87] : memref<16x128xf32, #tpu.memory_space<vmem>>, vector<16x128xf32>
        %99 = arith.addf %98, %97 : vector<16x128xf32>
        %c0_88 = arith.constant 0 : index
        %c0_89 = arith.constant 0 : index
        %100 = vector.load %arg18[%c0_88, %c0_89] : memref<16x128xf32, #tpu.memory_space<vmem>>, vector<16x128xf32>
        tpu.vector_store %arg18[%c0_88, %c0_89], %99 {strides = array<i32>} : memref<16x128xf32, #tpu.memory_space<vmem>>, vector<16x128xf32>,
        %c0_90 = arith.constant 0 : index
        %c0_91 = arith.constant 0 : index
        %101 = vector.load %arg17[%c0_90, %c0_91] : memref<16x128xf32, #tpu.memory_space<vmem>>, vector<16x128xf32>
        tpu.vector_store %arg17[%c0_90, %c0_91], %71 {strides = array<i32>} : memref<16x128xf32, #tpu.memory_space<vmem>>, vector<16x128xf32>,
        %cst_92 = arith.constant 1.000000e+00 : f32
        %102 = vector.broadcast %cst_92 : f32 to vector<2x1xf32>
        %103 = arith.subf %102, %91 : vector<2x1xf32>
        %104 = arith.mulf %54, %103 : vector<2x1xf32>
        %c0_93 = arith.constant 0 : index
        %c0_94 = arith.constant 0 : index
        %105 = vector.load %arg20[%c0_93, %c0_94] : memref<2x1xf32, #tpu.memory_space<vmem>>, vector<2x1xf32>
        tpu.vector_store %arg20[%c0_93, %c0_94], %104 {strides = array<i32>} : memref<2x1xf32, #tpu.memory_space<vmem>>, vector<2x1xf32>,
        %106 = vector.shape_cast %104 : vector<2x1xf32> to vector<1x2x1xf32>
        %cst_95 = arith.constant dense<0xFF800000> : vector<1xf32>
        %107 = vector.multi_reduction <maximumf>, %106, %cst_95 [1, 2] : vector<1x2x1xf32> to vector<1xf32>
        %108 = vector.shape_cast %107 : vector<1xf32> to vector<1x1x1xf32>
        %109 = vector.extract %108[0, 0, 0] : f32 from vector<1x1x1xf32>
        %cst_96 = arith.constant 1.000000e-07 : f32
        %110 = arith.cmpf ogt, %109, %cst_96 : f32
        %c1_i32_97 = arith.constant 1 : i32
        %c0_i32_98 = arith.constant 0 : i32
        %111 = arith.select %110, %c1_i32_97, %c0_i32_98 : i32
        %c1_99 = arith.constant 1 : index
        %112 = memref.load %arg21[%c1_99] : memref<2xi32, #tpu.memory_space<smem>>
        memref.store %111, %arg21[%c1_99] : memref<2xi32, #tpu.memory_space<smem>>
      } else {
      }
      %c0_i32_68 = arith.constant 0 : i32
      %49 = arith.cmpi eq, %45, %c0_i32_68 : i32
      %50 = arith.extui %49 : i1 to i32
      %c0_i32_69 = arith.constant 0 : i32
      %51 = arith.cmpi ne, %50, %c0_i32_69 : i32
      scf.if %51 {
        %c1_i32_70 = arith.constant 1 : i32
        %c0_71 = arith.constant 0 : index
        %52 = memref.load %arg21[%c0_71] : memref<2xi32, #tpu.memory_space<smem>>
        memref.store %c1_i32_70, %arg21[%c0_71] : memref<2xi32, #tpu.memory_space<smem>>
      } else {
      }
    } else {
    }
    %c0_56 = arith.constant 0 : index
    %38 = memref.load %arg21[%c0_56] : memref<2xi32, #tpu.memory_space<smem>>
    %c0_i32_57 = arith.constant 0 : i32
    %39 = arith.cmpi eq, %38, %c0_i32_57 : i32
    %40 = arith.extui %39 : i1 to i32
    %c0_i32_58 = arith.constant 0 : i32
    %41 = arith.cmpi ne, %40, %c0_i32_58 : i32
    scf.if %41 {
      %c2_i32 = arith.constant 2 : i32
      %c0_63 = arith.constant 0 : index
      %44 = memref.load %arg16[%c0_63] : memref<1xi32, #tpu.memory_space<smem>>
      memref.store %c2_i32, %arg16[%c0_63] : memref<1xi32, #tpu.memory_space<smem>>
      %c1_64 = arith.constant 1 : index
      %45 = memref.load %arg21[%c1_64] : memref<2xi32, #tpu.memory_space<smem>>
      %c1_i32_65 = arith.constant 1 : i32
      %46 = arith.cmpi eq, %45, %c1_i32_65 : i32
      %47 = arith.extui %46 : i1 to i32
      %c0_i32_66 = arith.constant 0 : i32
      %48 = arith.cmpi ne, %47, %c0_i32_66 : i32
      scf.if %48 {
        %c0_69 = arith.constant 0 : index
        %c0_70 = arith.constant 0 : index
        %52 = vector.load %arg17[%c0_69, %c0_70] : memref<16x128xf32, #tpu.memory_space<vmem>>, vector<16x128xf32>
        %53 = arith.truncf %52 : vector<16x128xf32> to vector<16x128xbf16>
        %c0_71 = arith.constant 0 : index
        %c0_72 = arith.constant 0 : index
        %54 = vector.load %arg20[%c0_71, %c0_72] : memref<2x1xf32, #tpu.memory_space<vmem>>, vector<2x1xf32>
        %cst_73 = arith.constant dense<0.000000e+00> : vector<32x128xf32>
        %55 = tpu.matmul %16, %53, %cst_73 {dimension_numbers = #tpu.dot_dimension_numbers<[1], [0], [0], [1], [0, 0, 1, 1], [], []>} : vector<32x16xbf16>, vector<16x128xbf16>, vector<32x128xf32> -> vector<32x128xf32>
        %56 = arith.truncf %55 : vector<32x128xf32> to vector<32x128xbf16>
        %57 = tpu.concatenate %56, %29 in 1 : vector<32x128xbf16>, vector<32x128xbf16> -> vector<32x256xbf16>
        %cst_74 = arith.constant dense<0.000000e+00> : vector<32x128xf32>
        %58 = tpu.matmul %57, %21, %cst_74 {dimension_numbers = #tpu.dot_dimension_numbers<[1], [0], [0], [1], [0, 0, 1, 1], [], []>} : vector<32x256xbf16>, vector<256x128xbf16>, vector<32x128xf32> -> vector<32x128xf32>
        %59 = vector.broadcast %22 : vector<1x128xf32> to vector<32x128xf32>
        %60 = arith.addf %58, %59 : vector<32x128xf32>
        %cst_75 = arith.constant 0.000000e+00 : f32
        %61 = vector.broadcast %cst_75 : f32 to vector<32x128xf32>
        %62 = arith.maximumf %60, %61 : vector<32x128xf32>
        %63 = arith.truncf %62 : vector<32x128xf32> to vector<32x128xbf16>
        %cst_76 = arith.constant dense<0.000000e+00> : vector<16x128xf32>
        %64 = tpu.matmul %17, %63, %cst_76 {dimension_numbers = #tpu.dot_dimension_numbers<[1], [0], [0], [1], [0, 0, 1, 1], [], []>} : vector<16x32xbf16>, vector<32x128xbf16>, vector<16x128xf32> -> vector<16x128xf32>
        %65 = arith.truncf %64 : vector<16x128xf32> to vector<16x128xbf16>
        %66 = tpu.concatenate %53, %65 in 1 : vector<16x128xbf16>, vector<16x128xbf16> -> vector<16x256xbf16>
        %cst_77 = arith.constant dense<0.000000e+00> : vector<16x128xf32>
        %67 = tpu.matmul %66, %23, %cst_77 {dimension_numbers = #tpu.dot_dimension_numbers<[1], [0], [0], [1], [0, 0, 1, 1], [], []>} : vector<16x256xbf16>, vector<256x128xbf16>, vector<16x128xf32> -> vector<16x128xf32>
        %68 = vector.broadcast %24 : vector<1x128xf32> to vector<16x128xf32>
        %69 = arith.addf %67, %68 : vector<16x128xf32>
        %cst_78 = arith.constant 0.000000e+00 : f32
        %70 = vector.broadcast %cst_78 : f32 to vector<16x128xf32>
        %71 = arith.maximumf %69, %70 : vector<16x128xf32>
        %cst_79 = arith.constant dense<0.000000e+00> : vector<2x128xf32>
        %72 = tpu.matmul %18, %53, %cst_79 {dimension_numbers = #tpu.dot_dimension_numbers<[1], [0], [0], [1], [0, 0, 1, 1], [], []>} : vector<2x16xbf16>, vector<16x128xbf16>, vector<2x128xf32> -> vector<2x128xf32>
        %73 = vector.broadcast %20 : vector<2x1xf32> to vector<2x128xf32>
        %74 = arith.mulf %72, %73 : vector<2x128xf32>
        %75 = arith.truncf %74 : vector<2x128xf32> to vector<2x128xbf16>
        %cst_80 = arith.constant dense<0.000000e+00> : vector<2x128xf32>
        %76 = tpu.matmul %75, %25, %cst_80 {dimension_numbers = #tpu.dot_dimension_numbers<[1], [0], [0], [1], [0, 0, 1, 1], [], []>} : vector<2x128xbf16>, vector<128x128xbf16>, vector<2x128xf32> -> vector<2x128xf32>
        %77 = vector.broadcast %26 : vector<1x128xf32> to vector<2x128xf32>
        %78 = arith.addf %76, %77 : vector<2x128xf32>
        %cst_81 = arith.constant 0.000000e+00 : f32
        %79 = vector.broadcast %cst_81 : f32 to vector<2x128xf32>
        %80 = arith.maximumf %78, %79 : vector<2x128xf32>
        %81 = vector.broadcast %27 : vector<1x128xf32> to vector<2x128xf32>
        %82 = arith.mulf %80, %81 : vector<2x128xf32>
        %cst_82 = arith.constant dense<0.000000e+00> : vector<2xf32>
        %83 = vector.multi_reduction <add>, %82, %cst_82 [1] : vector<2x128xf32> to vector<2xf32>
        %84 = vector.shape_cast %83 : vector<2xf32> to vector<2x1xf32>
        %85 = vector.broadcast %28 : vector<1x1xf32> to vector<2x1xf32>
        %86 = arith.addf %84, %85 : vector<2x1xf32>
        %87 = arith.negf %86 : vector<2x1xf32>
        %88 = math.exp %87 : vector<2x1xf32>
        %cst_83 = arith.constant 1.000000e+00 : f32
        %89 = vector.broadcast %cst_83 : f32 to vector<2x1xf32>
        %90 = arith.addf %89, %88 : vector<2x1xf32>
        %91 = arith.divf %89, %90 : vector<2x1xf32>
        %92 = arith.mulf %54, %91 : vector<2x1xf32>
        %93 = vector.shape_cast %92 : vector<2x1xf32> to vector<2x1xf32>
        %94 = vector.broadcast %93 : vector<2x1xf32> to vector<2x128xf32>
        %95 = arith.truncf %94 : vector<2x128xf32> to vector<2x128xbf16>
        %cst_84 = arith.constant dense<0.000000e+00> : vector<16x128xf32>
        %96 = tpu.matmul %19, %95, %cst_84 {dimension_numbers = #tpu.dot_dimension_numbers<[1], [0], [0], [1], [0, 0, 1, 1], [], []>} : vector<16x2xbf16>, vector<2x128xbf16>, vector<16x128xf32> -> vector<16x128xf32>
        %97 = arith.mulf %96, %71 : vector<16x128xf32>
        %c0_85 = arith.constant 0 : index
        %c0_86 = arith.constant 0 : index
        %98 = vector.load %arg18[%c0_85, %c0_86] : memref<16x128xf32, #tpu.memory_space<vmem>>, vector<16x128xf32>
        %99 = arith.addf %98, %97 : vector<16x128xf32>
        %c0_87 = arith.constant 0 : index
        %c0_88 = arith.constant 0 : index
        %100 = vector.load %arg18[%c0_87, %c0_88] : memref<16x128xf32, #tpu.memory_space<vmem>>, vector<16x128xf32>
        tpu.vector_store %arg18[%c0_87, %c0_88], %99 {strides = array<i32>} : memref<16x128xf32, #tpu.memory_space<vmem>>, vector<16x128xf32>,
        %c0_89 = arith.constant 0 : index
        %c0_90 = arith.constant 0 : index
        %101 = vector.load %arg17[%c0_89, %c0_90] : memref<16x128xf32, #tpu.memory_space<vmem>>, vector<16x128xf32>
        tpu.vector_store %arg17[%c0_89, %c0_90], %71 {strides = array<i32>} : memref<16x128xf32, #tpu.memory_space<vmem>>, vector<16x128xf32>,
        %cst_91 = arith.constant 1.000000e+00 : f32
        %102 = vector.broadcast %cst_91 : f32 to vector<2x1xf32>
        %103 = arith.subf %102, %91 : vector<2x1xf32>
        %104 = arith.mulf %54, %103 : vector<2x1xf32>
        %c0_92 = arith.constant 0 : index
        %c0_93 = arith.constant 0 : index
        %105 = vector.load %arg20[%c0_92, %c0_93] : memref<2x1xf32, #tpu.memory_space<vmem>>, vector<2x1xf32>
        tpu.vector_store %arg20[%c0_92, %c0_93], %104 {strides = array<i32>} : memref<2x1xf32, #tpu.memory_space<vmem>>, vector<2x1xf32>,
        %106 = vector.shape_cast %104 : vector<2x1xf32> to vector<1x2x1xf32>
        %cst_94 = arith.constant dense<0xFF800000> : vector<1xf32>
        %107 = vector.multi_reduction <maximumf>, %106, %cst_94 [1, 2] : vector<1x2x1xf32> to vector<1xf32>
        %108 = vector.shape_cast %107 : vector<1xf32> to vector<1x1x1xf32>
        %109 = vector.extract %108[0, 0, 0] : f32 from vector<1x1x1xf32>
        %cst_95 = arith.constant 1.000000e-07 : f32
        %110 = arith.cmpf ogt, %109, %cst_95 : f32
        %c1_i32_96 = arith.constant 1 : i32
        %c0_i32_97 = arith.constant 0 : i32
        %111 = arith.select %110, %c1_i32_96, %c0_i32_97 : i32
        %c1_98 = arith.constant 1 : index
        %112 = memref.load %arg21[%c1_98] : memref<2xi32, #tpu.memory_space<smem>>
        memref.store %111, %arg21[%c1_98] : memref<2xi32, #tpu.memory_space<smem>>
      } else {
      }
      %c0_i32_67 = arith.constant 0 : i32
      %49 = arith.cmpi eq, %45, %c0_i32_67 : i32
      %50 = arith.extui %49 : i1 to i32
      %c0_i32_68 = arith.constant 0 : i32
      %51 = arith.cmpi ne, %50, %c0_i32_68 : i32
      scf.if %51 {
        %c1_i32_69 = arith.constant 1 : i32
        %c0_70 = arith.constant 0 : index
        %52 = memref.load %arg21[%c0_70] : memref<2xi32, #tpu.memory_space<smem>>
        memref.store %c1_i32_69, %arg21[%c0_70] : memref<2xi32, #tpu.memory_space<smem>>
      } else {
      }
    } else {
    }
    %c0_59 = arith.constant 0 : index
    %c0_60 = arith.constant 0 : index
    %42 = vector.load %arg18[%c0_59, %c0_60] : memref<16x128xf32, #tpu.memory_space<vmem>>, vector<16x8xf32>
    %c0_61 = arith.constant 0 : index
    %c0_62 = arith.constant 0 : index
    %43 = vector.load %arg15[%c0_61, %c0_62] : memref<16x8xf32, #tpu.memory_space<vmem>>, vector<16x8xf32>
    tpu.vector_store %arg15[%c0_61, %c0_62], %42 {strides = array<i32>} : memref<16x8xf32, #tpu.memory_space<vmem>>, vector<16x8xf32>,
    return
  }
}

</mosaic_0001>

<llo_original>
// kernel: tpu_custom_call.1
$region0: #{tpu_custom_call.1}
  #allocation0 [shape = 'u32[]', space=smem, size = 0x4, offset = 0x4, fixed_abs, tag = 'smem constant byte address 0x4 - core index']
  #allocation1 [shape = 'u32[144,128]{1,0:T(1,128)}', space=vmem, size = 0x12000, scoped, tag = 'internal scratch']
  #allocation2 [shape = 'f32[16,128]{1,0:T(8,128)}', space=vmem, size = 0x2000, scoped, tag = 'scratch operand']
  #allocation3 [shape = 'f32[16,128]{1,0:T(8,128)}', space=vmem, size = 0x2000, scoped, tag = 'scratch operand']
  #allocation4 [shape = 'bf16[32,128]{1,0:T(16,128)(2,1)}', space=vmem, size = 0x2000, scoped, tag = 'scratch operand']
  #allocation5 [shape = 'f32[2,1]{1,0:T(2,128)}', space=vmem, size = 0x400, scoped, tag = 'scratch operand']
  #allocation6 [shape = 's32[2]{0:T(128)}', space=smem, size = 0x200, scoped, tag = 'scratch operand']
  #allocation7 [shape = 'f32[1,1]{1,0:T(1,128)S(1)}', space=vmem, size = 0x200, scoped, tag = 'scoped memory for tpu_custom_call.1']
  %s0 = inlined_call_operand.vmem [shape: f32[16,8], index: 0, kind: input, shape index: {}]
  %s1 = inlined_call_operand.vmem [shape: f32[32,4], index: 1, kind: input, shape index: {}]
  %s2 = inlined_call_operand.vmem [shape: bf16[32,16], index: 2, kind: input, shape index: {}]
  %s3 = inlined_call_operand.hbm [shape: bf16[16,32], index: 3, kind: input, shape index: {}]
  %s4 = inlined_call_operand.vmem [shape: bf16[2,16], index: 4, kind: input, shape index: {}]
  %s5 = inlined_call_operand.vmem [shape: f32[2,1], index: 5, kind: input, shape index: {}]
  %s6 = inlined_call_operand.vmem [shape: bf16[16,2], index: 6, kind: input, shape index: {}]
  %s7 = inlined_call_operand.hbm [shape: bf16[256,128], index: 7, kind: input, shape index: {}]
  %s8 = inlined_call_operand.vmem [shape: f32[1,128], index: 8, kind: input, shape index: {}]
  %s9 = inlined_call_operand.vmem [shape: bf16[256,128], index: 9, kind: input, shape index: {}]
  %s10 = inlined_call_operand.vmem [shape: f32[1,128], index: 10, kind: input, shape index: {}]
  %s11 = inlined_call_operand.hbm [shape: bf16[128,128], index: 11, kind: input, shape index: {}]
  %s12 = inlined_call_operand.vmem [shape: f32[1,128], index: 12, kind: input, shape index: {}]
  %s13 = inlined_call_operand.vmem [shape: f32[1,128], index: 13, kind: input, shape index: {}]
  %s14 = inlined_call_operand.<no memory space> [shape: f32[1,1], index: 14, kind: input, shape index: {}]
  %s15 = inlined_call_operand.vmem [shape: f32[16,8], index: 15, kind: output, shape index: {0}]
  %s16 = inlined_call_operand.hbm [shape: s32[1], index: 16, kind: output, shape index: {1}]
  %17 = xla_tuple %s15, %s16
  %s18 = sld [smem:[#allocation0]]
  $region126: #{tpu_custom_call.1} parent=0
    _
  %s20 = ssub.s32 1, %s18
  %s21 = scalar_select 0, %s20, %s18
  %v22 = vstv %s14
  %23 = vst [vmem:[#allocation7] sm:$0x1] %v22
  $region1: #{tpu_custom_call.1} parent=0
    #allocation8 [shape = 'u8[4096]{0}', space=vmem, size = 0x1000, scoped, tag = 'input window, operand 3, single buffered']
    #allocation9 [shape = 's32[1]{0}', space=sflag, size = 0x4, scoped, tag = 'scoped memory for tpu_custom_call.1']
    #allocation10 [shape = 's32[1]{0}', space=sflag, size = 0x4, scoped, tag = 'scoped memory for tpu_custom_call.1']
    #allocation11 [shape = 'u8[65536]{0}', space=vmem, size = 0x10000, scoped, tag = 'input window, operand 7, single buffered']
    #allocation12 [shape = 's32[1]{0}', space=sflag, size = 0x4, scoped, tag = 'scoped memory for tpu_custom_call.1']
    #allocation13 [shape = 'u8[32768]{0}', space=vmem, size = 0x8000, scoped, tag = 'input window, operand 11, single buffered']
    #allocation14 [shape = 'u8[512]{0}', space=smem, size = 0x200, scoped, tag = 'output window, operand 1, single buffered']
    %24 = vsyncpa [#allocation9], 0
    %25 = vsyncpa [#allocation12], 0
    %26 = vsyncpa [#allocation10], 0
    // Predicated region
    $region2: #{tpu_custom_call.1} parent=1 // pred_check
      _
    $region3: #{tpu_custom_call.1} parent=1 // pred_check_branch
      %28 = sbr.rel (0) target = $region5
    $region4: #{tpu_custom_call.1} parent=1 // pred_region
      _
    $region5: #{tpu_custom_call.1} parent=1 // pred_fallthru
      _
    // Predicated region
    $region6: #{tpu_custom_call.1} parent=1 // pred_check
      _
    $region7: #{tpu_custom_call.1} parent=1 // pred_check_branch
      %30 = sbr.rel (0) target = $region9
    $region8: #{tpu_custom_call.1} parent=1 // pred_region
      _
    $region9: #{tpu_custom_call.1} parent=1 // pred_fallthru
      _
    // Predicated region
    $region10: #{tpu_custom_call.1} parent=1 // pred_check
      _
    $region11: #{tpu_custom_call.1} parent=1 // pred_check_branch
      %32 = sbr.rel (0) target = $region13
    $region12: #{tpu_custom_call.1} parent=1 // pred_region
      _
    $region13: #{tpu_custom_call.1} parent=1 // pred_fallthru
      _
    // Predicated region
    $region14: #{tpu_custom_call.1} parent=1 // pred_check
      _
    $region15: #{tpu_custom_call.1} parent=1 // pred_check_branch
      %34 = sbr.rel (0) target = $region17
    $region16: #{tpu_custom_call.1} parent=1 // pred_region
      %s36 = ssub.s32 128, 128
      %37 = vsyncadd [#allocation9], %s36
      %s38 = sshll.u32 [#allocation8], 4
      %s39 = int_to_ptr.vmem [resolvable:$true] %s38
      %44 = dma.hbm_to_vmem [thread:$0]  %s3, 128, %s39, [#allocation9], 64, 64, 4
    $region17: #{tpu_custom_call.1} parent=1 // pred_fallthru
      _
    // Predicated region
    $region18: #{tpu_custom_call.1} parent=1 // pred_check
      _
    $region19: #{tpu_custom_call.1} parent=1 // pred_check_branch
      %46 = sbr.rel (0) target = $region21
    $region20: #{tpu_custom_call.1} parent=1 // pred_region
      _
    $region21: #{tpu_custom_call.1} parent=1 // pred_fallthru
      _
    // Predicated region
    $region22: #{tpu_custom_call.1} parent=1 // pred_check
      _
    $region23: #{tpu_custom_call.1} parent=1 // pred_check_branch
      %48 = sbr.rel (0) target = $region25
    $region24: #{tpu_custom_call.1} parent=1 // pred_region
      _
    $region25: #{tpu_custom_call.1} parent=1 // pred_fallthru
      _
    // Predicated region
    $region26: #{tpu_custom_call.1} parent=1 // pred_check
      _
    $region27: #{tpu_custom_call.1} parent=1 // pred_check_branch
      %50 = sbr.rel (0) target = $region29
    $region28: #{tpu_custom_call.1} parent=1 // pred_region
      _
    $region29: #{tpu_custom_call.1} parent=1 // pred_fallthru
      _
    // Predicated region
    $region30: #{tpu_custom_call.1} parent=1 // pred_check
      _
    $region31: #{tpu_custom_call.1} parent=1 // pred_check_branch
      %52 = sbr.rel (0) target = $region33
    $region32: #{tpu_custom_call.1} parent=1 // pred_region
      %s54 = ssub.s32 2048, 2048
      %55 = vsyncadd [#allocation12], %s54
      %s56 = sshll.u32 [#allocation11], 4
      %s57 = int_to_ptr.vmem [resolvable:$true] %s56
      %62 = dma.hbm_to_vmem [thread:$0]  %s7, 2048, %s57, [#allocation12], 64, 64, 4
    $region33: #{tpu_custom_call.1} parent=1 // pred_fallthru
      _
    // Predicated region
    $region34: #{tpu_custom_call.1} parent=1 // pred_check
      _
    $region35: #{tpu_custom_call.1} parent=1 // pred_check_branch
      %64 = sbr.rel (0) target = $region37
    $region36: #{tpu_custom_call.1} parent=1 // pred_region
      _
    $region37: #{tpu_custom_call.1} parent=1 // pred_fallthru
      _
    // Predicated region
    $region38: #{tpu_custom_call.1} parent=1 // pred_check
      _
    $region39: #{tpu_custom_call.1} parent=1 // pred_check_branch
      %66 = sbr.rel (0) target = $region41
    $region40: #{tpu_custom_call.1} parent=1 // pred_region
      _
    $region41: #{tpu_custom_call.1} parent=1 // pred_fallthru
      _
    // Predicated region
    $region42: #{tpu_custom_call.1} parent=1 // pred_check
      _
    $region43: #{tpu_custom_call.1} parent=1 // pred_check_branch
      %68 = sbr.rel (0) target = $region45
    $region44: #{tpu_custom_call.1} parent=1 // pred_region
      _
    $region45: #{tpu_custom_call.1} parent=1 // pred_fallthru
      _
    // Predicated region
    $region46: #{tpu_custom_call.1} parent=1 // pred_check
      _
    $region47: #{tpu_custom_call.1} parent=1 // pred_check_branch
      %70 = sbr.rel (0) target = $region49
    $region48: #{tpu_custom_call.1} parent=1 // pred_region
      %s72 = ssub.s32 1024, 1024
      %73 = vsyncadd [#allocation12], %s72
      %s74 = sshll.u32 [#allocation13], 4
      %s75 = int_to_ptr.vmem [resolvable:$true] %s74
      %80 = dma.hbm_to_vmem [thread:$0]  %s11, 1024, %s75, [#allocation12], 64, 64, 4
    $region49: #{tpu_custom_call.1} parent=1 // pred_fallthru
      _
    // Predicated region
    $region50: #{tpu_custom_call.1} parent=1 // pred_check
      _
    $region51: #{tpu_custom_call.1} parent=1 // pred_check_branch
      %82 = sbr.rel (0) target = $region53
    $region52: #{tpu_custom_call.1} parent=1 // pred_region
      _
    $region53: #{tpu_custom_call.1} parent=1 // pred_fallthru
      _
    // Predicated region
    $region54: #{tpu_custom_call.1} parent=1 // pred_check
      _
    $region55: #{tpu_custom_call.1} parent=1 // pred_check_branch
      %84 = sbr.rel (0) target = $region57
    $region56: #{tpu_custom_call.1} parent=1 // pred_region
      _
    $region57: #{tpu_custom_call.1} parent=1 // pred_fallthru
      _
    // Predicated region
    $region58: #{tpu_custom_call.1} parent=1 // pred_check
      _
    $region59: #{tpu_custom_call.1} parent=1 // pred_check_branch
      %86 = sbr.rel (0) target = $region61
    $region60: #{tpu_custom_call.1} parent=1 // pred_region
      _
    $region61: #{tpu_custom_call.1} parent=1 // pred_fallthru
      _
    // Predicated region
    $region62: #{tpu_custom_call.1} parent=1 // pred_check
      _
    $region63: #{tpu_custom_call.1} parent=1 // pred_check_branch
      %88 = sbr.rel (0) target = $region65
    $region64: #{tpu_custom_call.1} parent=1 // pred_region
      %89 = dma.done [#allocation9], 128
    $region65: #{tpu_custom_call.1} parent=1 // pred_fallthru
      _
    // Predicated region
    $region66: #{tpu_custom_call.1} parent=1 // pred_check
      _
    $region67: #{tpu_custom_call.1} parent=1 // pred_check_branch
      %91 = sbr.rel (0) target = $region69
    $region68: #{tpu_custom_call.1} parent=1 // pred_region
      %92 = dma.done [#allocation12], 2048
    $region69: #{tpu_custom_call.1} parent=1 // pred_fallthru
      _
    // Predicated region
    $region70: #{tpu_custom_call.1} parent=1 // pred_check
      _
    $region71: #{tpu_custom_call.1} parent=1 // pred_check_branch
      %94 = sbr.rel (0) target = $region73
    $region72: #{tpu_custom_call.1} parent=1 // pred_region
      %95 = dma.done [#allocation12], 1024
    $region73: #{tpu_custom_call.1} parent=1 // pred_fallthru
      _
    %97 = vst [vmem:[#allocation2] sm:$0xff] 0.0
    %98 = vst [vmem:[#allocation2 + $0x8] sm:$0xff] 0.0
    %v99 = vld [vmem:[%s0] sm:$0xff]
    %v100 = vld [vmem:[%s0 + $0x8] sm:$0xff]
    %vm101 = vcmask 64512
    %102 = vst.msk [vmem:[#allocation2] sm:$0xff] %vm101, %v99
    %103 = vst.msk [vmem:[#allocation2 + $0x8] sm:$0xff] %vm101, %v100
    %v104 = vld [vmem:[#allocation2] sm:$0xff]
    %v105 = vld [vmem:[#allocation2 + $0x8] sm:$0xff]
    %106 = vst [vmem:[#allocation3] sm:$0xff] %v104
    %107 = vst [vmem:[#allocation3 + $0x8] sm:$0xff] %v105
    %108 = vst [vmem:[#allocation4] sm:$0xff] 0
    %109 = vst [vmem:[#allocation4 + $0x8] sm:$0xff] 0
    %v110 = vld [vmem:[%s1] sm:$0xff]
    %v111 = vld [vmem:[%s1 + $0x8] sm:$0xff]
    %v112 = vld [vmem:[%s1 + $0x10] sm:$0xff]
    %v113 = vld [vmem:[%s1 + $0x18] sm:$0xff]
    %v114 = vpack.c.bf16 %v111, %v110
    %v115 = vpack.c.bf16 %v113, %v112
    %vm116 = vcmask 31744
    %117 = vst.msk [vmem:[#allocation4] sm:$0xff] %vm116, %v114
    %118 = vst.msk [vmem:[#allocation4 + $0x8] sm:$0xff] %vm116, %v115
    %vm119 = vcmask 1024
    %120 = vst.msk [vmem:[#allocation5] sm:$0x3] %vm119, 1.0
    %s121 = scalar_lea.smem [#allocation14], 0
    %122 = sst [smem:[%s121]] 0
    %s123 = scalar_lea.smem [#allocation6], 0
    %124 = sst [smem:[%s123]] 0
    %s125 = scalar_lea.smem [#allocation6], 1
    %126 = sst [smem:[%s125]] 1
    %v127 = vld [vmem:[%s2] sm:$0xf]
    %v128 = vld [vmem:[%s2 + $0x4] sm:$0xf]
    %v129 = vld [vmem:[%s2 + $0x8] sm:$0xf]
    %v130 = vld [vmem:[%s2 + $0xc] sm:$0xf]
    %v131 = vld [vmem:[#allocation8] sm:$0xf]
    %v132 = vld [vmem:[#allocation8 + $0x4] sm:$0xf]
    %v133 = vld [vmem:[%s4] sm:$0x1]
    %v134 = vld [vmem:[%s6] sm:$0xf]
    %v135 = vld [vmem:[%s6 + $0x4] sm:$0xf]
    %v136 = vld [vmem:[%s5] sm:$0x3]
    %v137 = vld [vmem:[#allocation11] sm:$0xf]
    %v138 = vld [vmem:[#allocation11 + $0x4] sm:$0xf]
    %v139 = vld [vmem:[#allocation11 + $0x8] sm:$0xf]
    %v140 = vld [vmem:[#allocation11 + $0xc] sm:$0xf]
    %v141 = vld [vmem:[#allocation11 + $0x10] sm:$0xf]
    %v142 = vld [vmem:[#allocation11 + $0x14] sm:$0xf]
    %v143 = vld [vmem:[#allocation11 + $0x18] sm:$0xf]
    %v144 = vld [vmem:[#allocation11 + $0x1c] sm:$0xf]
    %v145 = vld [vmem:[#allocation11 + $0x20] sm:$0xf]
    %v146 = vld [vmem:[#allocation11 + $0x24] sm:$0xf]
    %v147 = vld [vmem:[#allocation11 + $0x28] sm:$0xf]
    %v148 = vld [vmem:[#allocation11 + $0x2c] sm:$0xf]
    %v149 = vld [vmem:[#allocation11 + $0x30] sm:$0xf]
    %v150 = vld [vmem:[#allocation11 + $0x34] sm:$0xf]
    %v151 = vld [vmem:[#allocation11 + $0x38] sm:$0xf]
    %v152 = vld [vmem:[#allocation11 + $0x3c] sm:$0xf]
    %v153 = vld [vmem:[#allocation11 + $0x40] sm:$0xf]
    %v154 = vld [vmem:[#allocation11 + $0x44] sm:$0xf]
    %v155 = vld [vmem:[#allocation11 + $0x48] sm:$0xf]
    %v156 = vld [vmem:[#allocation11 + $0x4c] sm:$0xf]
    %v157 = vld [vmem:[#allocation11 + $0x50] sm:$0xf]
    %v158 = vld [vmem:[#allocation11 + $0x54] sm:$0xf]
    %v159 = vld [vmem:[#allocation11 + $0x58] sm:$0xf]
    %v160 = vld [vmem:[#allocation11 + $0x5c] sm:$0xf]
    %v161 = vld [vmem:[#allocation11 + $0x60] sm:$0xf]
    %v162 = vld [vmem:[#allocation11 + $0x64] sm:$0xf]
    %v163 = vld [vmem:[#allocation11 + $0x68] sm:$0xf]
    %v164 = vld [vmem:[#allocation11 + $0x6c] sm:$0xf]
    %v165 = vld [vmem:[#allocation11 + $0x70] sm:$0xf]
    %v166 = vld [vmem:[#allocation11 + $0x74] sm:$0xf]
    %v167 = vld [vmem:[#allocation11 + $0x78] sm:$0xf]
    %v168 = vld [vmem:[#allocation11 + $0x7c] sm:$0xf]
    %v169 = vld [vmem:[%s8] sm:$0x1]
    %v170 = vld [vmem:[%s9] sm:$0xf]
    %v171 = vld [vmem:[%s9 + $0x4] sm:$0xf]
    %v172 = vld [vmem:[%s9 + $0x8] sm:$0xf]
    %v173 = vld [vmem:[%s9 + $0xc] sm:$0xf]
    %v174 = vld [vmem:[%s9 + $0x10] sm:$0xf]
    %v175 = vld [vmem:[%s9 + $0x14] sm:$0xf]
    %v176 = vld [vmem:[%s9 + $0x18] sm:$0xf]
    %v177 = vld [vmem:[%s9 + $0x1c] sm:$0xf]
    %v178 = vld [vmem:[%s9 + $0x20] sm:$0xf]
    %v179 = vld [vmem:[%s9 + $0x24] sm:$0xf]
    %v180 = vld [vmem:[%s9 + $0x28] sm:$0xf]
    %v181 = vld [vmem:[%s9 + $0x2c] sm:$0xf]
    %v182 = vld [vmem:[%s9 + $0x30] sm:$0xf]
    %v183 = vld [vmem:[%s9 + $0x34] sm:$0xf]
    %v184 = vld [vmem:[%s9 + $0x38] sm:$0xf]
    %v185 = vld [vmem:[%s9 + $0x3c] sm:$0xf]
    %v186 = vld [vmem:[%s9 + $0x40] sm:$0xf]
    %v187 = vld [vmem:[%s9 + $0x44] sm:$0xf]
    %v188 = vld [vmem:[%s9 + $0x48] sm:$0xf]
    %v189 = vld [vmem:[%s9 + $0x4c] sm:$0xf]
    %v190 = vld [vmem:[%s9 + $0x50] sm:$0xf]
    %v191 = vld [vmem:[%s9 + $0x54] sm:$0xf]
    %v192 = vld [vmem:[%s9 + $0x58] sm:$0xf]
    %v193 = vld [vmem:[%s9 + $0x5c] sm:$0xf]
    %v194 = vld [vmem:[%s9 + $0x60] sm:$0xf]
    %v195 = vld [vmem:[%s9 + $0x64] sm:$0xf]
    %v196 = vld [vmem:[%s9 + $0x68] sm:$0xf]
    %v197 = vld [vmem:[%s9 + $0x6c] sm:$0xf]
    %v198 = vld [vmem:[%s9 + $0x70] sm:$0xf]
    %v199 = vld [vmem:[%s9 + $0x74] sm:$0xf]
    %v200 = vld [vmem:[%s9 + $0x78] sm:$0xf]
    %v201 = vld [vmem:[%s9 + $0x7c] sm:$0xf]
    %v202 = vld [vmem:[%s10] sm:$0x1]
    %v203 = vld [vmem:[#allocation13] sm:$0xf]
    %v204 = vld [vmem:[#allocation13 + $0x4] sm:$0xf]
    %v205 = vld [vmem:[#allocation13 + $0x8] sm:$0xf]
    %v206 = vld [vmem:[#allocation13 + $0xc] sm:$0xf]
    %v207 = vld [vmem:[#allocation13 + $0x10] sm:$0xf]
    %v208 = vld [vmem:[#allocation13 + $0x14] sm:$0xf]
    %v209 = vld [vmem:[#allocation13 + $0x18] sm:$0xf]
    %v210 = vld [vmem:[#allocation13 + $0x1c] sm:$0xf]
    %v211 = vld [vmem:[#allocation13 + $0x20] sm:$0xf]
    %v212 = vld [vmem:[#allocation13 + $0x24] sm:$0xf]
    %v213 = vld [vmem:[#allocation13 + $0x28] sm:$0xf]
    %v214 = vld [vmem:[#allocation13 + $0x2c] sm:$0xf]
    %v215 = vld [vmem:[#allocation13 + $0x30] sm:$0xf]
    %v216 = vld [vmem:[#allocation13 + $0x34] sm:$0xf]
    %v217 = vld [vmem:[#allocation13 + $0x38] sm:$0xf]
    %v218 = vld [vmem:[#allocation13 + $0x3c] sm:$0xf]
    %v219 = vld [vmem:[%s12] sm:$0x1]
    %v220 = vld [vmem:[%s13] sm:$0x1]
    %v221 = vld [vmem:[#allocation7] sm:$0x1]
    %v222 = vld [vmem:[#allocation4] sm:$0xff]
    %v223 = vld [vmem:[#allocation4 + $0x8] sm:$0xff]
    %s224 = sld [smem:[#allocation6]]
    %p225 = scmp.eq.s32.totalorder %s224, 0
    // Predicated region
    $region74: #{tpu_custom_call.1} parent=1 // pred_check
      %p226 = pneg %p225
    $region75: #{tpu_custom_call.1} parent=1 // pred_check_branch
      %228 = sbr.rel (%p226) target = $region77
    $region76: #{tpu_custom_call.1} parent=1 // pred_region
      %229 = sst [smem:[%s121]] 0
      %s230 = sld [smem:[#allocation6 + $0x1]]
      %p231 = scmp.eq.s32.totalorder %s230, 1
      // Predicated region
      $region78: #{tpu_custom_call.1} parent=76 // pred_check
        %p232 = pneg %p231
      $region79: #{tpu_custom_call.1} parent=76 // pred_check_branch
        %234 = sbr.rel (%p232) target = $region81
      $region80: #{tpu_custom_call.1} parent=76 // pred_region
        %v235 = vld [vmem:[#allocation2] sm:$0xff]
        %v236 = vld [vmem:[#allocation2 + $0x8] sm:$0xff]
        %v237 = vpack.c.bf16 %v236, %v235
        %v238 = vld [vmem:[#allocation5] sm:$0x3]
        %v243 = vunpack.c.l.b16 %v127
        %v244 = vunpack.c.l.b16 %v128
        %v245 = vunpack.c.l.b16 %v129
        %v246 = vunpack.c.l.b16 %v130
        %v247 = vpack.c.b16 %v244, %v243
        %v248 = vpack.c.b16 %v246, %v245
        %vm249 = vcmask 130048
        %v251 = vsel %vm249, %v247, 0
        %v254 = vsel %vm249, %v248, 0
        %256 = vmatprep.subr.bf16.mxu0 0
        %257 = vmatpush1.bf16.msra.mxu0 %v237
        %258 = vmatprep.subr.bf16.mxu0 0
        %259 = vmatpush1.bf16.msra.mxu0 0
        %260 = vmatprep.subr.bf16.mxu0 0
        %261 = vmatpush1.bf16.msra.mxu0 0
        %262 = vmatprep.subr.bf16.mxu0 0
        %263 = vmatpush1.bf16.msra.mxu0 0
        %264 = vmatprep.subr.bf16.mxu0 0
        %265 = vmatpush1.bf16.msra.mxu0 0
        %266 = vmatprep.subr.bf16.mxu0 0
        %267 = vmatpush1.bf16.msra.mxu0 0
        %268 = vmatprep.subr.bf16.mxu0 0
        %269 = vmatpush1.bf16.msra.mxu0 0
        %270 = vmatprep.subr.bf16.mxu0 0
        %271 = vmatpush1.bf16.msra.mxu0 0
        %272 = vmatprep.subr.bf16.mxu0 0
        %273 = vmatpush1.bf16.msra.mxu0 0
        %274 = vmatprep.subr.bf16.mxu0 0
        %275 = vmatpush1.bf16.msra.mxu0 0
        %276 = vmatprep.subr.bf16.mxu0 0
        %277 = vmatpush1.bf16.msra.mxu0 0
        %278 = vmatprep.subr.bf16.mxu0 0
        %279 = vmatpush1.bf16.msra.mxu0 0
        %280 = vmatprep.subr.bf16.mxu0 0
        %281 = vmatpush1.bf16.msra.mxu0 0
        %282 = vmatprep.subr.bf16.mxu0 0
        %283 = vmatpush1.bf16.msra.mxu0 0
        %284 = vmatprep.subr.bf16.mxu0 0
        %285 = vmatpush1.bf16.msra.mxu0 0
        %286 = vmatprep.subr.bf16.mxu0 0
        %287 = vmatpush1.bf16.msra.mxu0 0
        %288 = vmatprep.mubr.bf16.mxu0 0
        %289 = vmatmul.mubr.bf16.gmra.mrb[0].mxu0 %v251
        %v290 = vpop.f32.mrb[0].mxu0
        %v291 = vadd.f32 0.0, %v290
        %v292 = vpop.f32.mrb[0].mxu0
        %v293 = vpop.f32.mrb[0].mxu0
        %v294 = vadd.f32 0.0, %v293
        %v295 = vpop.f32.mrb[0].mxu0
        %296 = vmatprep.mubr.bf16.mxu0 0
        %297 = vmatmul.mubr.bf16.gmra.mrb[0].mxu0 %v254
        %v298 = vpop.f32.mrb[0].mxu0
        %v299 = vadd.f32 0.0, %v298
        %v300 = vpop.f32.mrb[0].mxu0
        %v301 = vpop.f32.mrb[0].mxu0
        %v302 = vadd.f32 0.0, %v301
        %v303 = vpop.f32.mrb[0].mxu0
        %304 = vdwg.mxu0
        %v305 = vpack.c.bf16 %v294, %v291
        %v306 = vpack.c.bf16 %v302, %v299
        %v308 = vlaneseq
        %v309 = vshrl.u32 %v308, 7
        %v310 = vsub.s32 0, %v309
        %v311 = vrot.slane %v169, %v310
        %v345 = vunpack.c.l.b16 %v137
        %v346 = vunpack.c.l.b16 %v138
        %v347 = vunpack.c.l.b16 %v139
        %v348 = vunpack.c.l.b16 %v140
        %v349 = vunpack.c.l.b16 %v141
        %v350 = vunpack.c.l.b16 %v142
        %v351 = vunpack.c.l.b16 %v143
        %v352 = vunpack.c.l.b16 %v144
        %v353 = vunpack.c.l.b16 %v145
        %v354 = vunpack.c.l.b16 %v146
        %v355 = vunpack.c.l.b16 %v147
        %v356 = vunpack.c.l.b16 %v148
        %v357 = vunpack.c.l.b16 %v149
        %v358 = vunpack.c.l.b16 %v150
        %v359 = vunpack.c.l.b16 %v151
        %v360 = vunpack.c.l.b16 %v152
        %v361 = vunpack.c.l.b16 %v153
        %v362 = vunpack.c.l.b16 %v154
        %v363 = vunpack.c.l.b16 %v155
        %v364 = vunpack.c.l.b16 %v156
        %v365 = vunpack.c.l.b16 %v157
        %v366 = vunpack.c.l.b16 %v158
        %v367 = vunpack.c.l.b16 %v159
        %v368 = vunpack.c.l.b16 %v160
        %v369 = vunpack.c.l.b16 %v161
        %v370 = vunpack.c.l.b16 %v162
        %v371 = vunpack.c.l.b16 %v163
        %v372 = vunpack.c.l.b16 %v164
        %v373 = vunpack.c.l.b16 %v165
        %v374 = vunpack.c.l.b16 %v166
        %v375 = vunpack.c.l.b16 %v167
        %v376 = vunpack.c.l.b16 %v168
        %v377 = vpack.c.b16 %v346, %v345
        %v378 = vpack.c.b16 %v348, %v347
        %v379 = vpack.c.b16 %v350, %v349
        %v380 = vpack.c.b16 %v352, %v351
        %v381 = vpack.c.b16 %v354, %v353
        %v382 = vpack.c.b16 %v356, %v355
        %v383 = vpack.c.b16 %v358, %v357
        %v384 = vpack.c.b16 %v360, %v359
        %v385 = vpack.c.b16 %v362, %v361
        %v386 = vpack.c.b16 %v364, %v363
        %v387 = vpack.c.b16 %v366, %v365
        %v388 = vpack.c.b16 %v368, %v367
        %v389 = vpack.c.b16 %v370, %v369
        %v390 = vpack.c.b16 %v372, %v371
        %v391 = vpack.c.b16 %v374, %v373
        %v392 = vpack.c.b16 %v376, %v375
        %409 = vmatprep.subr.bf16.mxu0 0
        %410 = vmatpush1.bf16.msra.mxu0 %v377
        %411 = vmatprep.subr.bf16.mxu0 0
        %412 = vmatpush1.bf16.msra.mxu0 %v378
        %413 = vmatprep.subr.bf16.mxu0 0
        %414 = vmatpush1.bf16.msra.mxu0 %v379
        %415 = vmatprep.subr.bf16.mxu0 0
        %416 = vmatpush1.bf16.msra.mxu0 %v380
        %417 = vmatprep.subr.bf16.mxu0 0
        %418 = vmatpush1.bf16.msra.mxu0 %v381
        %419 = vmatprep.subr.bf16.mxu0 0
        %420 = vmatpush1.bf16.msra.mxu0 %v382
        %421 = vmatprep.subr.bf16.mxu0 0
        %422 = vmatpush1.bf16.msra.mxu0 %v383
        %423 = vmatprep.subr.bf16.mxu0 0
        %424 = vmatpush1.bf16.msra.mxu0 %v384
        %425 = vmatprep.subr.bf16.mxu0 0
        %426 = vmatpush1.bf16.msra.mxu0 %v385
        %427 = vmatprep.subr.bf16.mxu0 0
        %428 = vmatpush1.bf16.msra.mxu0 %v386
        %429 = vmatprep.subr.bf16.mxu0 0
        %430 = vmatpush1.bf16.msra.mxu0 %v387
        %431 = vmatprep.subr.bf16.mxu0 0
        %432 = vmatpush1.bf16.msra.mxu0 %v388
        %433 = vmatprep.subr.bf16.mxu0 0
        %434 = vmatpush1.bf16.msra.mxu0 %v389
        %435 = vmatprep.subr.bf16.mxu0 0
        %436 = vmatpush1.bf16.msra.mxu0 %v390
        %437 = vmatprep.subr.bf16.mxu0 0
        %438 = vmatpush1.bf16.msra.mxu0 %v391
        %439 = vmatprep.subr.bf16.mxu0 0
        %440 = vmatpush1.bf16.msra.mxu0 %v392
        %441 = vmatprep.mubr.bf16.mxu0 %v222
        %442 = vmatmul.mubr.bf16.gmra.mrb[0].mxu0 %v305
        %v443 = vpop.f32.mrb[0].mxu0
        %v444 = vadd.f32 %v311, %v443
        %v445 = vpop.f32.mrb[0].mxu0
        %v446 = vpop.f32.mrb[0].mxu0
        %v447 = vadd.f32 %v311, %v446
        %v448 = vpop.f32.mrb[0].mxu0
        %449 = vmatprep.mubr.bf16.mxu0 %v223
        %450 = vmatmul.mubr.bf16.gmra.mrb[0].mxu0 %v306
        %v451 = vpop.f32.mrb[0].mxu0
        %v452 = vadd.f32 %v311, %v451
        %v453 = vpop.f32.mrb[0].mxu0
        %v454 = vpop.f32.mrb[0].mxu0
        %v455 = vadd.f32 %v311, %v454
        %v456 = vpop.f32.mrb[0].mxu0
        %457 = vdwg.mxu0
        %v458 = vmax.f32 %v444, 0.0
        %v459 = vmax.f32 %v447, 0.0
        %v460 = vmax.f32 %v452, 0.0
        %v461 = vmax.f32 %v455, 0.0
        %v462 = vpack.c.bf16 %v459, %v458
        %v463 = vpack.c.bf16 %v461, %v460
        %v466 = vunpack.c.l.b16 %v131
        %v467 = vunpack.c.l.b16 %v132
        %v468 = vpack.c.b16 %v467, %v466
        %vm469 = vcmask 261120
        %v471 = vsel %vm469, %v468, 0
        %473 = vmatprep.subr.bf16.mxu0 0
        %474 = vmatpush1.bf16.msra.mxu0 %v462
        %475 = vmatprep.subr.bf16.mxu0 0
        %476 = vmatpush1.bf16.msra.mxu0 %v463
        %477 = vmatprep.subr.bf16.mxu0 0
        %478 = vmatpush1.bf16.msra.mxu0 0
        %479 = vmatprep.subr.bf16.mxu0 0
        %480 = vmatpush1.bf16.msra.mxu0 0
        %481 = vmatprep.subr.bf16.mxu0 0
        %482 = vmatpush1.bf16.msra.mxu0 0
        %483 = vmatprep.subr.bf16.mxu0 0
        %484 = vmatpush1.bf16.msra.mxu0 0
        %485 = vmatprep.subr.bf16.mxu0 0
        %486 = vmatpush1.bf16.msra.mxu0 0
        %487 = vmatprep.subr.bf16.mxu0 0
        %488 = vmatpush1.bf16.msra.mxu0 0
        %489 = vmatprep.subr.bf16.mxu0 0
        %490 = vmatpush1.bf16.msra.mxu0 0
        %491 = vmatprep.subr.bf16.mxu0 0
        %492 = vmatpush1.bf16.msra.mxu0 0
        %493 = vmatprep.subr.bf16.mxu0 0
        %494 = vmatpush1.bf16.msra.mxu0 0
        %495 = vmatprep.subr.bf16.mxu0 0
        %496 = vmatpush1.bf16.msra.mxu0 0
        %497 = vmatprep.subr.bf16.mxu0 0
        %498 = vmatpush1.bf16.msra.mxu0 0
        %499 = vmatprep.subr.bf16.mxu0 0
        %500 = vmatpush1.bf16.msra.mxu0 0
        %501 = vmatprep.subr.bf16.mxu0 0
        %502 = vmatpush1.bf16.msra.mxu0 0
        %503 = vmatprep.subr.bf16.mxu0 0
        %504 = vmatpush1.bf16.msra.mxu0 0
        %505 = vmatprep.mubr.bf16.mxu0 0
        %506 = vmatmul.mubr.bf16.gmra.mrb[0].mxu0 %v471
        %v507 = vpop.f32.mrb[0].mxu0
        %v508 = vadd.f32 0.0, %v507
        %v509 = vpop.f32.mrb[0].mxu0
        %v510 = vpop.f32.mrb[0].mxu0
        %v511 = vadd.f32 0.0, %v510
        %v512 = vpop.f32.mrb[0].mxu0
        %513 = vdwg.mxu0
        %v514 = vpack.c.bf16 %v511, %v508
        %v516 = vlaneseq
        %v517 = vshrl.u32 %v516, 7
        %v518 = vsub.s32 0, %v517
        %v519 = vrot.slane %v202, %v518
        %v553 = vunpack.c.l.b16 %v170
        %v554 = vunpack.c.l.b16 %v171
        %v555 = vunpack.c.l.b16 %v172
        %v556 = vunpack.c.l.b16 %v173
        %v557 = vunpack.c.l.b16 %v174
        %v558 = vunpack.c.l.b16 %v175
        %v559 = vunpack.c.l.b16 %v176
        %v560 = vunpack.c.l.b16 %v177
        %v561 = vunpack.c.l.b16 %v178
        %v562 = vunpack.c.l.b16 %v179
        %v563 = vunpack.c.l.b16 %v180
        %v564 = vunpack.c.l.b16 %v181
        %v565 = vunpack.c.l.b16 %v182
        %v566 = vunpack.c.l.b16 %v183
        %v567 = vunpack.c.l.b16 %v184
        %v568 = vunpack.c.l.b16 %v185
        %v569 = vunpack.c.l.b16 %v186
        %v570 = vunpack.c.l.b16 %v187
        %v571 = vunpack.c.l.b16 %v188
        %v572 = vunpack.c.l.b16 %v189
        %v573 = vunpack.c.l.b16 %v190
        %v574 = vunpack.c.l.b16 %v191
        %v575 = vunpack.c.l.b16 %v192
        %v576 = vunpack.c.l.b16 %v193
        %v577 = vunpack.c.l.b16 %v194
        %v578 = vunpack.c.l.b16 %v195
        %v579 = vunpack.c.l.b16 %v196
        %v580 = vunpack.c.l.b16 %v197
        %v581 = vunpack.c.l.b16 %v198
        %v582 = vunpack.c.l.b16 %v199
        %v583 = vunpack.c.l.b16 %v200
        %v584 = vunpack.c.l.b16 %v201
        %v585 = vpack.c.b16 %v554, %v553
        %v586 = vpack.c.b16 %v556, %v555
        %v587 = vpack.c.b16 %v558, %v557
        %v588 = vpack.c.b16 %v560, %v559
        %v589 = vpack.c.b16 %v562, %v561
        %v590 = vpack.c.b16 %v564, %v563
        %v591 = vpack.c.b16 %v566, %v565
        %v592 = vpack.c.b16 %v568, %v567
        %v593 = vpack.c.b16 %v570, %v569
        %v594 = vpack.c.b16 %v572, %v571
        %v595 = vpack.c.b16 %v574, %v573
        %v596 = vpack.c.b16 %v576, %v575
        %v597 = vpack.c.b16 %v578, %v577
        %v598 = vpack.c.b16 %v580, %v579
        %v599 = vpack.c.b16 %v582, %v581
        %v600 = vpack.c.b16 %v584, %v583
        %617 = vmatprep.subr.bf16.mxu0 0
        %618 = vmatpush1.bf16.msra.mxu0 %v585
        %619 = vmatprep.subr.bf16.mxu0 0
        %620 = vmatpush1.bf16.msra.mxu0 %v586
        %621 = vmatprep.subr.bf16.mxu0 0
        %622 = vmatpush1.bf16.msra.mxu0 %v587
        %623 = vmatprep.subr.bf16.mxu0 0
        %624 = vmatpush1.bf16.msra.mxu0 %v588
        %625 = vmatprep.subr.bf16.mxu0 0
        %626 = vmatpush1.bf16.msra.mxu0 %v589
        %627 = vmatprep.subr.bf16.mxu0 0
        %628 = vmatpush1.bf16.msra.mxu0 %v590
        %629 = vmatprep.subr.bf16.mxu0 0
        %630 = vmatpush1.bf16.msra.mxu0 %v591
        %631 = vmatprep.subr.bf16.mxu0 0
        %632 = vmatpush1.bf16.msra.mxu0 %v592
        %633 = vmatprep.subr.bf16.mxu0 0
        %634 = vmatpush1.bf16.msra.mxu0 %v593
        %635 = vmatprep.subr.bf16.mxu0 0
        %636 = vmatpush1.bf16.msra.mxu0 %v594
        %637 = vmatprep.subr.bf16.mxu0 0
        %638 = vmatpush1.bf16.msra.mxu0 %v595
        %639 = vmatprep.subr.bf16.mxu0 0
        %640 = vmatpush1.bf16.msra.mxu0 %v596
        %641 = vmatprep.subr.bf16.mxu0 0
        %642 = vmatpush1.bf16.msra.mxu0 %v597
        %643 = vmatprep.subr.bf16.mxu0 0
        %644 = vmatpush1.bf16.msra.mxu0 %v598
        %645 = vmatprep.subr.bf16.mxu0 0
        %646 = vmatpush1.bf16.msra.mxu0 %v599
        %647 = vmatprep.subr.bf16.mxu0 0
        %648 = vmatpush1.bf16.msra.mxu0 %v600
        %649 = vmatprep.mubr.bf16.mxu0 %v514
        %650 = vmatmul.mubr.bf16.gmra.mrb[0].mxu0 %v237
        %v651 = vpop.f32.mrb[0].mxu0
        %v652 = vadd.f32 %v519, %v651
        %v653 = vpop.f32.mrb[0].mxu0
        %v654 = vpop.f32.mrb[0].mxu0
        %v655 = vadd.f32 %v519, %v654
        %v656 = vpop.f32.mrb[0].mxu0
        %657 = vdwg.mxu0
        %v658 = vmax.f32 %v652, 0.0
        %v659 = vmax.f32 %v655, 0.0
        %v661 = vsel %vm249, %v133, 0
        %663 = vmatprep.subr.bf16.mxu0 0
        %664 = vmatpush1.bf16.msra.mxu0 %v237
        %665 = vmatprep.subr.bf16.mxu0 0
        %666 = vmatpush1.bf16.msra.mxu0 0
        %667 = vmatprep.subr.bf16.mxu0 0
        %668 = vmatpush1.bf16.msra.mxu0 0
        %669 = vmatprep.subr.bf16.mxu0 0
        %670 = vmatpush1.bf16.msra.mxu0 0
        %671 = vmatprep.subr.bf16.mxu0 0
        %672 = vmatpush1.bf16.msra.mxu0 0
        %673 = vmatprep.subr.bf16.mxu0 0
        %674 = vmatpush1.bf16.msra.mxu0 0
        %675 = vmatprep.subr.bf16.mxu0 0
        %676 = vmatpush1.bf16.msra.mxu0 0
        %677 = vmatprep.subr.bf16.mxu0 0
        %678 = vmatpush1.bf16.msra.mxu0 0
        %679 = vmatprep.subr.bf16.mxu0 0
        %680 = vmatpush1.bf16.msra.mxu0 0
        %681 = vmatprep.subr.bf16.mxu0 0
        %682 = vmatpush1.bf16.msra.mxu0 0
        %683 = vmatprep.subr.bf16.mxu0 0
        %684 = vmatpush1.bf16.msra.mxu0 0
        %685 = vmatprep.subr.bf16.mxu0 0
        %686 = vmatpush1.bf16.msra.mxu0 0
        %687 = vmatprep.subr.bf16.mxu0 0
        %688 = vmatpush1.bf16.msra.mxu0 0
        %689 = vmatprep.subr.bf16.mxu0 0
        %690 = vmatpush1.bf16.msra.mxu0 0
        %691 = vmatprep.subr.bf16.mxu0 0
        %692 = vmatpush1.bf16.msra.mxu0 0
        %693 = vmatprep.subr.bf16.mxu0 0
        %694 = vmatpush1.bf16.msra.mxu0 0
        %695 = vmatprep.mubr.bf16.mxu0 0
        %696 = vmatmul.mubr.bf16.gmra.mrb[0].mxu0 %v661
        %v697 = vpop.f32.mrb[0].mxu0
        %v698 = vadd.f32 0.0, %v697
        %v699 = vpop.f32.mrb[0].mxu0
        %v700 = vpop.f32.mrb[0].mxu0
        %v701 = vpop.f32.mrb[0].mxu0
        %702 = vdwg.mxu0
        %704 = vset.pattern.permute.xlu0 0
        %705 = vperm.xlu0 %704, %v136
        %v706 = vpop.permute.xlu0 %705
        %v708 = vmul.f32 %v698, %v706
        %v709 = vpack.c.bf16 %v708, %v708
        %v711 = vlaneseq
        %v712 = vshrl.u32 %v711, 7
        %v713 = vsub.s32 0, %v712
        %v714 = vrot.slane %v219, %v713
        %v732 = vunpack.c.l.b16 %v203
        %v733 = vunpack.c.l.b16 %v204
        %v734 = vunpack.c.l.b16 %v205
        %v735 = vunpack.c.l.b16 %v206
        %v736 = vunpack.c.l.b16 %v207
        %v737 = vunpack.c.l.b16 %v208
        %v738 = vunpack.c.l.b16 %v209
        %v739 = vunpack.c.l.b16 %v210
        %v740 = vunpack.c.l.b16 %v211
        %v741 = vunpack.c.l.b16 %v212
        %v742 = vunpack.c.l.b16 %v213
        %v743 = vunpack.c.l.b16 %v214
        %v744 = vunpack.c.l.b16 %v215
        %v745 = vunpack.c.l.b16 %v216
        %v746 = vunpack.c.l.b16 %v217
        %v747 = vunpack.c.l.b16 %v218
        %v748 = vpack.c.b16 %v733, %v732
        %v749 = vpack.c.b16 %v735, %v734
        %v750 = vpack.c.b16 %v737, %v736
        %v751 = vpack.c.b16 %v739, %v738
        %v752 = vpack.c.b16 %v741, %v740
        %v753 = vpack.c.b16 %v743, %v742
        %v754 = vpack.c.b16 %v745, %v744
        %v755 = vpack.c.b16 %v747, %v746
        %764 = vmatprep.subr.bf16.mxu0 0
        %765 = vmatpush1.bf16.msra.mxu0 %v748
        %766 = vmatprep.subr.bf16.mxu0 0
        %767 = vmatpush1.bf16.msra.mxu0 %v749
        %768 = vmatprep.subr.bf16.mxu0 0
        %769 = vmatpush1.bf16.msra.mxu0 %v750
        %770 = vmatprep.subr.bf16.mxu0 0
        %771 = vmatpush1.bf16.msra.mxu0 %v751
        %772 = vmatprep.subr.bf16.mxu0 0
        %773 = vmatpush1.bf16.msra.mxu0 %v752
        %774 = vmatprep.subr.bf16.mxu0 0
        %775 = vmatpush1.bf16.msra.mxu0 %v753
        %776 = vmatprep.subr.bf16.mxu0 0
        %777 = vmatpush1.bf16.msra.mxu0 %v754
        %778 = vmatprep.subr.bf16.mxu0 0
        %779 = vmatpush1.bf16.msra.mxu0 %v755
        %780 = vmatprep.subr.bf16.mxu0 0
        %781 = vmatpush1.bf16.msra.mxu0 0
        %782 = vmatprep.subr.bf16.mxu0 0
        %783 = vmatpush1.bf16.msra.mxu0 0
        %784 = vmatprep.subr.bf16.mxu0 0
        %785 = vmatpush1.bf16.msra.mxu0 0
        %786 = vmatprep.subr.bf16.mxu0 0
        %787 = vmatpush1.bf16.msra.mxu0 0
        %788 = vmatprep.subr.bf16.mxu0 0
        %789 = vmatpush1.bf16.msra.mxu0 0
        %790 = vmatprep.subr.bf16.mxu0 0
        %791 = vmatpush1.bf16.msra.mxu0 0
        %792 = vmatprep.subr.bf16.mxu0 0
        %793 = vmatpush1.bf16.msra.mxu0 0
        %794 = vmatprep.subr.bf16.mxu0 0
        %795 = vmatpush1.bf16.msra.mxu0 0
        %796 = vmatprep.mubr.bf16.mxu0 0
        %797 = vmatmul.mubr.bf16.gmra.mrb[0].mxu0 %v709
        %v798 = vpop.f32.mrb[0].mxu0
        %v799 = vadd.f32 %v714, %v798
        %v800 = vpop.f32.mrb[0].mxu0
        %v801 = vpop.f32.mrb[0].mxu0
        %v802 = vpop.f32.mrb[0].mxu0
        %803 = vdwg.mxu0
        %v804 = vmax.f32 %v799, 0.0
        %v806 = vlaneseq
        %v807 = vshrl.u32 %v806, 7
        %v808 = vsub.s32 0, %v807
        %v809 = vrot.slane %v220, %v808
        %v811 = vmul.f32 %v804, %v809
        %vm812 = vcmask 1041408
        %v813 = vsel %vm812, %v811, 0.0
        %814 = vadd.xlane.f32.xlu0 %v813
        %v815 = vpop.xlane.xlu0 %814
        %v817 = vlaneseq
        %v818 = vshrl.u32 %v817, 7
        %v819 = vsub.s32 0, %v818
        %v820 = vrot.slane %v221, %v819
        %v822 = vadd.f32 %v815, %v820
        %v823 = vxor.u32 %v822, 2147483648
        %v824 = vmul.f32 %v823, 1.442695
        %v825 = vpow.pop %v824
        %v826 = vadd.f32 %v825, 1.0
        %v827 = vrcp.pop %v826
        %v828 = vmul.f32 1.0, %v827
        %v829 = vmul.f32 %v238, %v828
        %831 = vset.pattern.permute.xlu0 0
        %832 = vperm.xlu0 %831, %v829
        %v833 = vpop.permute.xlu0 %832
        %v835 = vpack.c.bf16 %v833, %v833
        %v838 = vunpack.c.l.b16 %v134
        %v839 = vunpack.c.l.b16 %v135
        %v840 = vpack.c.b16 %v839, %v838
        %vm841 = vcmask 15360
        %v843 = vsel %vm841, %v840, 0
        %vm845 = vcmask 1040384
        %v847 = vsel %vm845, %v835, 0
        %849 = vmatprep.subr.bf16.mxu0 0
        %850 = vmatpush1.bf16.msra.mxu0 %v847
        %851 = vmatprep.subr.bf16.mxu0 0
        %852 = vmatpush1.bf16.msra.mxu0 0
        %853 = vmatprep.subr.bf16.mxu0 0
        %854 = vmatpush1.bf16.msra.mxu0 0
        %855 = vmatprep.subr.bf16.mxu0 0
        %856 = vmatpush1.bf16.msra.mxu0 0
        %857 = vmatprep.subr.bf16.mxu0 0
        %858 = vmatpush1.bf16.msra.mxu0 0
        %859 = vmatprep.subr.bf16.mxu0 0
        %860 = vmatpush1.bf16.msra.mxu0 0
        %861 = vmatprep.subr.bf16.mxu0 0
        %862 = vmatpush1.bf16.msra.mxu0 0
        %863 = vmatprep.subr.bf16.mxu0 0
        %864 = vmatpush1.bf16.msra.mxu0 0
        %865 = vmatprep.subr.bf16.mxu0 0
        %866 = vmatpush1.bf16.msra.mxu0 0
        %867 = vmatprep.subr.bf16.mxu0 0
        %868 = vmatpush1.bf16.msra.mxu0 0
        %869 = vmatprep.subr.bf16.mxu0 0
        %870 = vmatpush1.bf16.msra.mxu0 0
        %871 = vmatprep.subr.bf16.mxu0 0
        %872 = vmatpush1.bf16.msra.mxu0 0
        %873 = vmatprep.subr.bf16.mxu0 0
        %874 = vmatpush1.bf16.msra.mxu0 0
        %875 = vmatprep.subr.bf16.mxu0 0
        %876 = vmatpush1.bf16.msra.mxu0 0
        %877 = vmatprep.subr.bf16.mxu0 0
        %878 = vmatpush1.bf16.msra.mxu0 0
        %879 = vmatprep.subr.bf16.mxu0 0
        %880 = vmatpush1.bf16.msra.mxu0 0
        %881 = vmatprep.mubr.bf16.mxu0 0
        %882 = vmatmul.mubr.bf16.gmra.mrb[0].mxu0 %v843
        %v883 = vpop.f32.mrb[0].mxu0
        %v884 = vadd.f32 0.0, %v883
        %v885 = vpop.f32.mrb[0].mxu0
        %v886 = vpop.f32.mrb[0].mxu0
        %v887 = vadd.f32 0.0, %v886
        %v888 = vpop.f32.mrb[0].mxu0
        %889 = vdwg.mxu0
        %v890 = vmul.f32 %v884, %v658
        %v891 = vmul.f32 %v887, %v659
        %892 = vst [vmem:[#allocation3] sm:$0xff] %v890
        %893 = vst [vmem:[#allocation3 + $0x8] sm:$0xff] %v891
        %894 = vst [vmem:[#allocation2] sm:$0xff] %v658
        %895 = vst [vmem:[#allocation2 + $0x8] sm:$0xff] %v659
        %v896 = vsub.f32 1.0, %v828
        %v897 = vmul.f32 %v238, %v896
        %898 = vst.msk [vmem:[#allocation5] sm:$0x3] %vm119, %v897
        %v899 = vsel %vm119, %v897, -inf
        %900 = vmax.xlane.f32.xlu0 %v899
        %v901 = vpop.xlane.xlu0 %900
        %v902 = vrot.slane %v901, 4
        %v903 = vmax.f32 %v901, %v902
        %v904 = vrot.slane %v903, 2
        %v905 = vmax.f32 %v903, %v904
        %v906 = vrot.slane %v905, 1
        %v907 = vmax.f32 %v905, %v906
        %s908 = vtos %v907
        %p909 = scmp.gt.f32.partialorder %s908, 1e-07
        %s910 = scalar_select %p909, 1, 0
        %911 = sst [smem:[%s125]] %s910
      $region81: #{tpu_custom_call.1} parent=76 // pred_fallthru
        _
      %p912 = scmp.eq.s32.totalorder %s230, 0
      // Predicated region
      $region82: #{tpu_custom_call.1} parent=76 // pred_check
        %p913 = pneg %p912
      $region83: #{tpu_custom_call.1} parent=76 // pred_check_branch
        %915 = sbr.rel (%p913) target = $region85
      $region84: #{tpu_custom_call.1} parent=76 // pred_region
        %916 = sst [smem:[%s123]] 1
      $region85: #{tpu_custom_call.1} parent=76 // pred_fallthru
        _
    $region77: #{tpu_custom_call.1} parent=1 // pred_fallthru
      _
    %s917 = sld [smem:[#allocation6]]
    %p918 = scmp.eq.s32.totalorder %s917, 0
    // Predicated region
    $region86: #{tpu_custom_call.1} parent=1 // pred_check
      %p919 = pneg %p918
    $region87: #{tpu_custom_call.1} parent=1 // pred_check_branch
      %921 = sbr.rel (%p919) target = $region89
    $region88: #{tpu_custom_call.1} parent=1 // pred_region
      %922 = sst [smem:[%s121]] 1
      %s923 = sld [smem:[#allocation6 + $0x1]]
      %p924 = scmp.eq.s32.totalorder %s923, 1
      // Predicated region
      $region90: #{tpu_custom_call.1} parent=88 // pred_check
        %p925 = pneg %p924
      $region91: #{tpu_custom_call.1} parent=88 // pred_check_branch
        %927 = sbr.rel (%p925) target = $region93
      $region92: #{tpu_custom_call.1} parent=88 // pred_region
        %v928 = vld [vmem:[#allocation2] sm:$0xff]
        %v929 = vld [vmem:[#allocation2 + $0x8] sm:$0xff]
        %v930 = vpack.c.bf16 %v929, %v928
        %v931 = vld [vmem:[#allocation5] sm:$0x3]
        %v936 = vunpack.c.l.b16 %v127
        %v937 = vunpack.c.l.b16 %v128
        %v938 = vunpack.c.l.b16 %v129
        %v939 = vunpack.c.l.b16 %v130
        %v940 = vpack.c.b16 %v937, %v936
        %v941 = vpack.c.b16 %v939, %v938
        %vm942 = vcmask 130048
        %v944 = vsel %vm942, %v940, 0
        %v947 = vsel %vm942, %v941, 0
        %949 = vmatprep.subr.bf16.mxu0 0
        %950 = vmatpush1.bf16.msra.mxu0 %v930
        %951 = vmatprep.subr.bf16.mxu0 0
        %952 = vmatpush1.bf16.msra.mxu0 0
        %953 = vmatprep.subr.bf16.mxu0 0
        %954 = vmatpush1.bf16.msra.mxu0 0
        %955 = vmatprep.subr.bf16.mxu0 0
        %956 = vmatpush1.bf16.msra.mxu0 0
        %957 = vmatprep.subr.bf16.mxu0 0
        %958 = vmatpush1.bf16.msra.mxu0 0
        %959 = vmatprep.subr.bf16.mxu0 0
        %960 = vmatpush1.bf16.msra.mxu0 0
        %961 = vmatprep.subr.bf16.mxu0 0
        %962 = vmatpush1.bf16.msra.mxu0 0
        %963 = vmatprep.subr.bf16.mxu0 0
        %964 = vmatpush1.bf16.msra.mxu0 0
        %965 = vmatprep.subr.bf16.mxu0 0
        %966 = vmatpush1.bf16.msra.mxu0 0
        %967 = vmatprep.subr.bf16.mxu0 0
        %968 = vmatpush1.bf16.msra.mxu0 0
        %969 = vmatprep.subr.bf16.mxu0 0
        %970 = vmatpush1.bf16.msra.mxu0 0
        %971 = vmatprep.subr.bf16.mxu0 0
        %972 = vmatpush1.bf16.msra.mxu0 0
        %973 = vmatprep.subr.bf16.mxu0 0
        %974 = vmatpush1.bf16.msra.mxu0 0
        %975 = vmatprep.subr.bf16.mxu0 0
        %976 = vmatpush1.bf16.msra.mxu0 0
        %977 = vmatprep.subr.bf16.mxu0 0
        %978 = vmatpush1.bf16.msra.mxu0 0
        %979 = vmatprep.subr.bf16.mxu0 0
        %980 = vmatpush1.bf16.msra.mxu0 0
        %981 = vmatprep.mubr.bf16.mxu0 0
        %982 = vmatmul.mubr.bf16.gmra.mrb[0].mxu0 %v944
        %v983 = vpop.f32.mrb[0].mxu0
        %v984 = vadd.f32 0.0, %v983
        %v985 = vpop.f32.mrb[0].mxu0
        %v986 = vpop.f32.mrb[0].mxu0
        %v987 = vadd.f32 0.0, %v986
        %v988 = vpop.f32.mrb[0].mxu0
        %989 = vmatprep.mubr.bf16.mxu0 0
        %990 = vmatmul.mubr.bf16.gmra.mrb[0].mxu0 %v947
        %v991 = vpop.f32.mrb[0].mxu0
        %v992 = vadd.f32 0.0, %v991
        %v993 = vpop.f32.mrb[0].mxu0
        %v994 = vpop.f32.mrb[0].mxu0
        %v995 = vadd.f32 0.0, %v994
        %v996 = vpop.f32.mrb[0].mxu0
        %997 = vdwg.mxu0
        %v998 = vpack.c.bf16 %v987, %v984
        %v999 = vpack.c.bf16 %v995, %v992
        %v1001 = vlaneseq
        %v1002 = vshrl.u32 %v1001, 7
        %v1003 = vsub.s32 0, %v1002
        %v1004 = vrot.slane %v169, %v1003
        %v1038 = vunpack.c.l.b16 %v137
        %v1039 = vunpack.c.l.b16 %v138
        %v1040 = vunpack.c.l.b16 %v139
        %v1041 = vunpack.c.l.b16 %v140
        %v1042 = vunpack.c.l.b16 %v141
        %v1043 = vunpack.c.l.b16 %v142
        %v1044 = vunpack.c.l.b16 %v143
        %v1045 = vunpack.c.l.b16 %v144
        %v1046 = vunpack.c.l.b16 %v145
        %v1047 = vunpack.c.l.b16 %v146
        %v1048 = vunpack.c.l.b16 %v147
        %v1049 = vunpack.c.l.b16 %v148
        %v1050 = vunpack.c.l.b16 %v149
        %v1051 = vunpack.c.l.b16 %v150
        %v1052 = vunpack.c.l.b16 %v151
        %v1053 = vunpack.c.l.b16 %v152
        %v1054 = vunpack.c.l.b16 %v153
        %v1055 = vunpack.c.l.b16 %v154
        %v1056 = vunpack.c.l.b16 %v155
        %v1057 = vunpack.c.l.b16 %v156
        %v1058 = vunpack.c.l.b16 %v157
        %v1059 = vunpack.c.l.b16 %v158
        %v1060 = vunpack.c.l.b16 %v159
        %v1061 = vunpack.c.l.b16 %v160
        %v1062 = vunpack.c.l.b16 %v161
        %v1063 = vunpack.c.l.b16 %v162
        %v1064 = vunpack.c.l.b16 %v163
        %v1065 = vunpack.c.l.b16 %v164
        %v1066 = vunpack.c.l.b16 %v165
        %v1067 = vunpack.c.l.b16 %v166
        %v1068 = vunpack.c.l.b16 %v167
        %v1069 = vunpack.c.l.b16 %v168
        %v1070 = vpack.c.b16 %v1039, %v1038
        %v1071 = vpack.c.b16 %v1041, %v1040
        %v1072 = vpack.c.b16 %v1043, %v1042
        %v1073 = vpack.c.b16 %v1045, %v1044
        %v1074 = vpack.c.b16 %v1047, %v1046
        %v1075 = vpack.c.b16 %v1049, %v1048
        %v1076 = vpack.c.b16 %v1051, %v1050
        %v1077 = vpack.c.b16 %v1053, %v1052
        %v1078 = vpack.c.b16 %v1055, %v1054
        %v1079 = vpack.c.b16 %v1057, %v1056
        %v1080 = vpack.c.b16 %v1059, %v1058
        %v1081 = vpack.c.b16 %v1061, %v1060
        %v1082 = vpack.c.b16 %v1063, %v1062
        %v1083 = vpack.c.b16 %v1065, %v1064
        %v1084 = vpack.c.b16 %v1067, %v1066
        %v1085 = vpack.c.b16 %v1069, %v1068
        %1102 = vmatprep.subr.bf16.mxu0 0
        %1103 = vmatpush1.bf16.msra.mxu0 %v1070
        %1104 = vmatprep.subr.bf16.mxu0 0
        %1105 = vmatpush1.bf16.msra.mxu0 %v1071
        %1106 = vmatprep.subr.bf16.mxu0 0
        %1107 = vmatpush1.bf16.msra.mxu0 %v1072
        %1108 = vmatprep.subr.bf16.mxu0 0
        %1109 = vmatpush1.bf16.msra.mxu0 %v1073
        %1110 = vmatprep.subr.bf16.mxu0 0
        %1111 = vmatpush1.bf16.msra.mxu0 %v1074
        %1112 = vmatprep.subr.bf16.mxu0 0
        %1113 = vmatpush1.bf16.msra.mxu0 %v1075
        %1114 = vmatprep.subr.bf16.mxu0 0
        %1115 = vmatpush1.bf16.msra.mxu0 %v1076
        %1116 = vmatprep.subr.bf16.mxu0 0
        %1117 = vmatpush1.bf16.msra.mxu0 %v1077
        %1118 = vmatprep.subr.bf16.mxu0 0
        %1119 = vmatpush1.bf16.msra.mxu0 %v1078
        %1120 = vmatprep.subr.bf16.mxu0 0
        %1121 = vmatpush1.bf16.msra.mxu0 %v1079
        %1122 = vmatprep.subr.bf16.mxu0 0
        %1123 = vmatpush1.bf16.msra.mxu0 %v1080
        %1124 = vmatprep.subr.bf16.mxu0 0
        %1125 = vmatpush1.bf16.msra.mxu0 %v1081
        %1126 = vmatprep.subr.bf16.mxu0 0
        %1127 = vmatpush1.bf16.msra.mxu0 %v1082
        %1128 = vmatprep.subr.bf16.mxu0 0
        %1129 = vmatpush1.bf16.msra.mxu0 %v1083
        %1130 = vmatprep.subr.bf16.mxu0 0
        %1131 = vmatpush1.bf16.msra.mxu0 %v1084
        %1132 = vmatprep.subr.bf16.mxu0 0
        %1133 = vmatpush1.bf16.msra.mxu0 %v1085
        %1134 = vmatprep.mubr.bf16.mxu0 %v222
        %1135 = vmatmul.mubr.bf16.gmra.mrb[0].mxu0 %v998
        %v1136 = vpop.f32.mrb[0].mxu0
        %v1137 = vadd.f32 %v1004, %v1136
        %v1138 = vpop.f32.mrb[0].mxu0
        %v1139 = vpop.f32.mrb[0].mxu0
        %v1140 = vadd.f32 %v1004, %v1139
        %v1141 = vpop.f32.mrb[0].mxu0
        %1142 = vmatprep.mubr.bf16.mxu0 %v223
        %1143 = vmatmul.mubr.bf16.gmra.mrb[0].mxu0 %v999
        %v1144 = vpop.f32.mrb[0].mxu0
        %v1145 = vadd.f32 %v1004, %v1144
        %v1146 = vpop.f32.mrb[0].mxu0
        %v1147 = vpop.f32.mrb[0].mxu0
        %v1148 = vadd.f32 %v1004, %v1147
        %v1149 = vpop.f32.mrb[0].mxu0
        %1150 = vdwg.mxu0
        %v1151 = vmax.f32 %v1137, 0.0
        %v1152 = vmax.f32 %v1140, 0.0
        %v1153 = vmax.f32 %v1145, 0.0
        %v1154 = vmax.f32 %v1148, 0.0
        %v1155 = vpack.c.bf16 %v1152, %v1151
        %v1156 = vpack.c.bf16 %v1154, %v1153
        %v1159 = vunpack.c.l.b16 %v131
        %v1160 = vunpack.c.l.b16 %v132
        %v1161 = vpack.c.b16 %v1160, %v1159
        %vm1162 = vcmask 261120
        %v1164 = vsel %vm1162, %v1161, 0
        %1166 = vmatprep.subr.bf16.mxu0 0
        %1167 = vmatpush1.bf16.msra.mxu0 %v1155
        %1168 = vmatprep.subr.bf16.mxu0 0
        %1169 = vmatpush1.bf16.msra.mxu0 %v1156
        %1170 = vmatprep.subr.bf16.mxu0 0
        %1171 = vmatpush1.bf16.msra.mxu0 0
        %1172 = vmatprep.subr.bf16.mxu0 0
        %1173 = vmatpush1.bf16.msra.mxu0 0
        %1174 = vmatprep.subr.bf16.mxu0 0
        %1175 = vmatpush1.bf16.msra.mxu0 0
        %1176 = vmatprep.subr.bf16.mxu0 0
        %1177 = vmatpush1.bf16.msra.mxu0 0
        %1178 = vmatprep.subr.bf16.mxu0 0
        %1179 = vmatpush1.bf16.msra.mxu0 0
        %1180 = vmatprep.subr.bf16.mxu0 0
        %1181 = vmatpush1.bf16.msra.mxu0 0
        %1182 = vmatprep.subr.bf16.mxu0 0
        %1183 = vmatpush1.bf16.msra.mxu0 0
        %1184 = vmatprep.subr.bf16.mxu0 0
        %1185 = vmatpush1.bf16.msra.mxu0 0
        %1186 = vmatprep.subr.bf16.mxu0 0
        %1187 = vmatpush1.bf16.msra.mxu0 0
        %1188 = vmatprep.subr.bf16.mxu0 0
        %1189 = vmatpush1.bf16.msra.mxu0 0
        %1190 = vmatprep.subr.bf16.mxu0 0
        %1191 = vmatpush1.bf16.msra.mxu0 0
        %1192 = vmatprep.subr.bf16.mxu0 0
        %1193 = vmatpush1.bf16.msra.mxu0 0
        %1194 = vmatprep.subr.bf16.mxu0 0
        %1195 = vmatpush1.bf16.msra.mxu0 0
        %1196 = vmatprep.subr.bf16.mxu0 0
        %1197 = vmatpush1.bf16.msra.mxu0 0
        %1198 = vmatprep.mubr.bf16.mxu0 0
        %1199 = vmatmul.mubr.bf16.gmra.mrb[0].mxu0 %v1164
        %v1200 = vpop.f32.mrb[0].mxu0
        %v1201 = vadd.f32 0.0, %v1200
        %v1202 = vpop.f32.mrb[0].mxu0
        %v1203 = vpop.f32.mrb[0].mxu0
        %v1204 = vadd.f32 0.0, %v1203
        %v1205 = vpop.f32.mrb[0].mxu0
        %1206 = vdwg.mxu0
        %v1207 = vpack.c.bf16 %v1204, %v1201
        %v1209 = vlaneseq
        %v1210 = vshrl.u32 %v1209, 7
        %v1211 = vsub.s32 0, %v1210
        %v1212 = vrot.slane %v202, %v1211
        %v1246 = vunpack.c.l.b16 %v170
        %v1247 = vunpack.c.l.b16 %v171
        %v1248 = vunpack.c.l.b16 %v172
        %v1249 = vunpack.c.l.b16 %v173
        %v1250 = vunpack.c.l.b16 %v174
        %v1251 = vunpack.c.l.b16 %v175
        %v1252 = vunpack.c.l.b16 %v176
        %v1253 = vunpack.c.l.b16 %v177
        %v1254 = vunpack.c.l.b16 %v178
        %v1255 = vunpack.c.l.b16 %v179
        %v1256 = vunpack.c.l.b16 %v180
        %v1257 = vunpack.c.l.b16 %v181
        %v1258 = vunpack.c.l.b16 %v182
        %v1259 = vunpack.c.l.b16 %v183
        %v1260 = vunpack.c.l.b16 %v184
        %v1261 = vunpack.c.l.b16 %v185
        %v1262 = vunpack.c.l.b16 %v186
        %v1263 = vunpack.c.l.b16 %v187
        %v1264 = vunpack.c.l.b16 %v188
        %v1265 = vunpack.c.l.b16 %v189
        %v1266 = vunpack.c.l.b16 %v190
        %v1267 = vunpack.c.l.b16 %v191
        %v1268 = vunpack.c.l.b16 %v192
        %v1269 = vunpack.c.l.b16 %v193
        %v1270 = vunpack.c.l.b16 %v194
        %v1271 = vunpack.c.l.b16 %v195
        %v1272 = vunpack.c.l.b16 %v196
        %v1273 = vunpack.c.l.b16 %v197
        %v1274 = vunpack.c.l.b16 %v198
        %v1275 = vunpack.c.l.b16 %v199
        %v1276 = vunpack.c.l.b16 %v200
        %v1277 = vunpack.c.l.b16 %v201
        %v1278 = vpack.c.b16 %v1247, %v1246
        %v1279 = vpack.c.b16 %v1249, %v1248
        %v1280 = vpack.c.b16 %v1251, %v1250
        %v1281 = vpack.c.b16 %v1253, %v1252
        %v1282 = vpack.c.b16 %v1255, %v1254
        %v1283 = vpack.c.b16 %v1257, %v1256
        %v1284 = vpack.c.b16 %v1259, %v1258
        %v1285 = vpack.c.b16 %v1261, %v1260
        %v1286 = vpack.c.b16 %v1263, %v1262
        %v1287 = vpack.c.b16 %v1265, %v1264
        %v1288 = vpack.c.b16 %v1267, %v1266
        %v1289 = vpack.c.b16 %v1269, %v1268
        %v1290 = vpack.c.b16 %v1271, %v1270
        %v1291 = vpack.c.b16 %v1273, %v1272
        %v1292 = vpack.c.b16 %v1275, %v1274
        %v1293 = vpack.c.b16 %v1277, %v1276
        %1310 = vmatprep.subr.bf16.mxu0 0
        %1311 = vmatpush1.bf16.msra.mxu0 %v1278
        %1312 = vmatprep.subr.bf16.mxu0 0
        %1313 = vmatpush1.bf16.msra.mxu0 %v1279
        %1314 = vmatprep.subr.bf16.mxu0 0
        %1315 = vmatpush1.bf16.msra.mxu0 %v1280
        %1316 = vmatprep.subr.bf16.mxu0 0
        %1317 = vmatpush1.bf16.msra.mxu0 %v1281
        %1318 = vmatprep.subr.bf16.mxu0 0
        %1319 = vmatpush1.bf16.msra.mxu0 %v1282
        %1320 = vmatprep.subr.bf16.mxu0 0
        %1321 = vmatpush1.bf16.msra.mxu0 %v1283
        %1322 = vmatprep.subr.bf16.mxu0 0
        %1323 = vmatpush1.bf16.msra.mxu0 %v1284
        %1324 = vmatprep.subr.bf16.mxu0 0
        %1325 = vmatpush1.bf16.msra.mxu0 %v1285
        %1326 = vmatprep.subr.bf16.mxu0 0
        %1327 = vmatpush1.bf16.msra.mxu0 %v1286
        %1328 = vmatprep.subr.bf16.mxu0 0
        %1329 = vmatpush1.bf16.msra.mxu0 %v1287
        %1330 = vmatprep.subr.bf16.mxu0 0
        %1331 = vmatpush1.bf16.msra.mxu0 %v1288
        %1332 = vmatprep.subr.bf16.mxu0 0
        %1333 = vmatpush1.bf16.msra.mxu0 %v1289
        %1334 = vmatprep.subr.bf16.mxu0 0
        %1335 = vmatpush1.bf16.msra.mxu0 %v1290
        %1336 = vmatprep.subr.bf16.mxu0 0
        %1337 = vmatpush1.bf16.msra.mxu0 %v1291
        %1338 = vmatprep.subr.bf16.mxu0 0
        %1339 = vmatpush1.bf16.msra.mxu0 %v1292
        %1340 = vmatprep.subr.bf16.mxu0 0
        %1341 = vmatpush1.bf16.msra.mxu0 %v1293
        %1342 = vmatprep.mubr.bf16.mxu0 %v1207
        %1343 = vmatmul.mubr.bf16.gmra.mrb[0].mxu0 %v930
        %v1344 = vpop.f32.mrb[0].mxu0
        %v1345 = vadd.f32 %v1212, %v1344
        %v1346 = vpop.f32.mrb[0].mxu0
        %v1347 = vpop.f32.mrb[0].mxu0
        %v1348 = vadd.f32 %v1212, %v1347
        %v1349 = vpop.f32.mrb[0].mxu0
        %1350 = vdwg.mxu0
        %v1351 = vmax.f32 %v1345, 0.0
        %v1352 = vmax.f32 %v1348, 0.0
        %v1354 = vsel %vm942, %v133, 0
        %1356 = vmatprep.subr.bf16.mxu0 0
        %1357 = vmatpush1.bf16.msra.mxu0 %v930
        %1358 = vmatprep.subr.bf16.mxu0 0
        %1359 = vmatpush1.bf16.msra.mxu0 0
        %1360 = vmatprep.subr.bf16.mxu0 0
        %1361 = vmatpush1.bf16.msra.mxu0 0
        %1362 = vmatprep.subr.bf16.mxu0 0
        %1363 = vmatpush1.bf16.msra.mxu0 0
        %1364 = vmatprep.subr.bf16.mxu0 0
        %1365 = vmatpush1.bf16.msra.mxu0 0
        %1366 = vmatprep.subr.bf16.mxu0 0
        %1367 = vmatpush1.bf16.msra.mxu0 0
        %1368 = vmatprep.subr.bf16.mxu0 0
        %1369 = vmatpush1.bf16.msra.mxu0 0
        %1370 = vmatprep.subr.bf16.mxu0 0
        %1371 = vmatpush1.bf16.msra.mxu0 0
        %1372 = vmatprep.subr.bf16.mxu0 0
        %1373 = vmatpush1.bf16.msra.mxu0 0
        %1374 = vmatprep.subr.bf16.mxu0 0
        %1375 = vmatpush1.bf16.msra.mxu0 0
        %1376 = vmatprep.subr.bf16.mxu0 0
        %1377 = vmatpush1.bf16.msra.mxu0 0
        %1378 = vmatprep.subr.bf16.mxu0 0
        %1379 = vmatpush1.bf16.msra.mxu0 0
        %1380 = vmatprep.subr.bf16.mxu0 0
        %1381 = vmatpush1.bf16.msra.mxu0 0
        %1382 = vmatprep.subr.bf16.mxu0 0
        %1383 = vmatpush1.bf16.msra.mxu0 0
        %1384 = vmatprep.subr.bf16.mxu0 0
        %1385 = vmatpush1.bf16.msra.mxu0 0
        %1386 = vmatprep.subr.bf16.mxu0 0
        %1387 = vmatpush1.bf16.msra.mxu0 0
        %1388 = vmatprep.mubr.bf16.mxu0 0
        %1389 = vmatmul.mubr.bf16.gmra.mrb[0].mxu0 %v1354
        %v1390 = vpop.f32.mrb[0].mxu0
        %v1391 = vadd.f32 0.0, %v1390
        %v1392 = vpop.f32.mrb[0].mxu0
        %v1393 = vpop.f32.mrb[0].mxu0
        %v1394 = vpop.f32.mrb[0].mxu0
        %1395 = vdwg.mxu0
        %1397 = vset.pattern.permute.xlu0 0
        %1398 = vperm.xlu0 %1397, %v136
        %v1399 = vpop.permute.xlu0 %1398
        %v1401 = vmul.f32 %v1391, %v1399
        %v1402 = vpack.c.bf16 %v1401, %v1401
        %v1404 = vlaneseq
        %v1405 = vshrl.u32 %v1404, 7
        %v1406 = vsub.s32 0, %v1405
        %v1407 = vrot.slane %v219, %v1406
        %v1425 = vunpack.c.l.b16 %v203
        %v1426 = vunpack.c.l.b16 %v204
        %v1427 = vunpack.c.l.b16 %v205
        %v1428 = vunpack.c.l.b16 %v206
        %v1429 = vunpack.c.l.b16 %v207
        %v1430 = vunpack.c.l.b16 %v208
        %v1431 = vunpack.c.l.b16 %v209
        %v1432 = vunpack.c.l.b16 %v210
        %v1433 = vunpack.c.l.b16 %v211
        %v1434 = vunpack.c.l.b16 %v212
        %v1435 = vunpack.c.l.b16 %v213
        %v1436 = vunpack.c.l.b16 %v214
        %v1437 = vunpack.c.l.b16 %v215
        %v1438 = vunpack.c.l.b16 %v216
        %v1439 = vunpack.c.l.b16 %v217
        %v1440 = vunpack.c.l.b16 %v218
        %v1441 = vpack.c.b16 %v1426, %v1425
        %v1442 = vpack.c.b16 %v1428, %v1427
        %v1443 = vpack.c.b16 %v1430, %v1429
        %v1444 = vpack.c.b16 %v1432, %v1431
        %v1445 = vpack.c.b16 %v1434, %v1433
        %v1446 = vpack.c.b16 %v1436, %v1435
        %v1447 = vpack.c.b16 %v1438, %v1437
        %v1448 = vpack.c.b16 %v1440, %v1439
        %1457 = vmatprep.subr.bf16.mxu0 0
        %1458 = vmatpush1.bf16.msra.mxu0 %v1441
        %1459 = vmatprep.subr.bf16.mxu0 0
        %1460 = vmatpush1.bf16.msra.mxu0 %v1442
        %1461 = vmatprep.subr.bf16.mxu0 0
        %1462 = vmatpush1.bf16.msra.mxu0 %v1443
        %1463 = vmatprep.subr.bf16.mxu0 0
        %1464 = vmatpush1.bf16.msra.mxu0 %v1444
        %1465 = vmatprep.subr.bf16.mxu0 0
        %1466 = vmatpush1.bf16.msra.mxu0 %v1445
        %1467 = vmatprep.subr.bf16.mxu0 0
        %1468 = vmatpush1.bf16.msra.mxu0 %v1446
        %1469 = vmatprep.subr.bf16.mxu0 0
        %1470 = vmatpush1.bf16.msra.mxu0 %v1447
        %1471 = vmatprep.subr.bf16.mxu0 0
        %1472 = vmatpush1.bf16.msra.mxu0 %v1448
        %1473 = vmatprep.subr.bf16.mxu0 0
        %1474 = vmatpush1.bf16.msra.mxu0 0
        %1475 = vmatprep.subr.bf16.mxu0 0
        %1476 = vmatpush1.bf16.msra.mxu0 0
        %1477 = vmatprep.subr.bf16.mxu0 0
        %1478 = vmatpush1.bf16.msra.mxu0 0
        %1479 = vmatprep.subr.bf16.mxu0 0
        %1480 = vmatpush1.bf16.msra.mxu0 0
        %1481 = vmatprep.subr.bf16.mxu0 0
        %1482 = vmatpush1.bf16.msra.mxu0 0
        %1483 = vmatprep.subr.bf16.mxu0 0
        %1484 = vmatpush1.bf16.msra.mxu0 0
        %1485 = vmatprep.subr.bf16.mxu0 0
        %1486 = vmatpush1.bf16.msra.mxu0 0
        %1487 = vmatprep.subr.bf16.mxu0 0
        %1488 = vmatpush1.bf16.msra.mxu0 0
        %1489 = vmatprep.mubr.bf16.mxu0 0
        %1490 = vmatmul.mubr.bf16.gmra.mrb[0].mxu0 %v1402
        %v1491 = vpop.f32.mrb[0].mxu0
        %v1492 = vadd.f32 %v1407, %v1491
        %v1493 = vpop.f32.mrb[0].mxu0
        %v1494 = vpop.f32.mrb[0].mxu0
        %v1495 = vpop.f32.mrb[0].mxu0
        %1496 = vdwg.mxu0
        %v1497 = vmax.f32 %v1492, 0.0
        %v1499 = vlaneseq
        %v1500 = vshrl.u32 %v1499, 7
        %v1501 = vsub.s32 0, %v1500
        %v1502 = vrot.slane %v220, %v1501
        %v1504 = vmul.f32 %v1497, %v1502
        %vm1505 = vcmask 1041408
        %v1506 = vsel %vm1505, %v1504, 0.0
        %1507 = vadd.xlane.f32.xlu0 %v1506
        %v1508 = vpop.xlane.xlu0 %1507
        %v1510 = vlaneseq
        %v1511 = vshrl.u32 %v1510, 7
        %v1512 = vsub.s32 0, %v1511
        %v1513 = vrot.slane %v221, %v1512
        %v1515 = vadd.f32 %v1508, %v1513
        %v1516 = vxor.u32 %v1515, 2147483648
        %v1517 = vmul.f32 %v1516, 1.442695
        %v1518 = vpow.pop %v1517
        %v1519 = vadd.f32 %v1518, 1.0
        %v1520 = vrcp.pop %v1519
        %v1521 = vmul.f32 1.0, %v1520
        %v1522 = vmul.f32 %v931, %v1521
        %1524 = vset.pattern.permute.xlu0 0
        %1525 = vperm.xlu0 %1524, %v1522
        %v1526 = vpop.permute.xlu0 %1525
        %v1528 = vpack.c.bf16 %v1526, %v1526
        %v1531 = vunpack.c.l.b16 %v134
        %v1532 = vunpack.c.l.b16 %v135
        %v1533 = vpack.c.b16 %v1532, %v1531
        %vm1534 = vcmask 15360
        %v1536 = vsel %vm1534, %v1533, 0
        %vm1538 = vcmask 1040384
        %v1540 = vsel %vm1538, %v1528, 0
        %1542 = vmatprep.subr.bf16.mxu0 0
        %1543 = vmatpush1.bf16.msra.mxu0 %v1540
        %1544 = vmatprep.subr.bf16.mxu0 0
        %1545 = vmatpush1.bf16.msra.mxu0 0
        %1546 = vmatprep.subr.bf16.mxu0 0
        %1547 = vmatpush1.bf16.msra.mxu0 0
        %1548 = vmatprep.subr.bf16.mxu0 0
        %1549 = vmatpush1.bf16.msra.mxu0 0
        %1550 = vmatprep.subr.bf16.mxu0 0
        %1551 = vmatpush1.bf16.msra.mxu0 0
        %1552 = vmatprep.subr.bf16.mxu0 0
        %1553 = vmatpush1.bf16.msra.mxu0 0
        %1554 = vmatprep.subr.bf16.mxu0 0
        %1555 = vmatpush1.bf16.msra.mxu0 0
        %1556 = vmatprep.subr.bf16.mxu0 0
        %1557 = vmatpush1.bf16.msra.mxu0 0
        %1558 = vmatprep.subr.bf16.mxu0 0
        %1559 = vmatpush1.bf16.msra.mxu0 0
        %1560 = vmatprep.subr.bf16.mxu0 0
        %1561 = vmatpush1.bf16.msra.mxu0 0
        %1562 = vmatprep.subr.bf16.mxu0 0
        %1563 = vmatpush1.bf16.msra.mxu0 0
        %1564 = vmatprep.subr.bf16.mxu0 0
        %1565 = vmatpush1.bf16.msra.mxu0 0
        %1566 = vmatprep.subr.bf16.mxu0 0
        %1567 = vmatpush1.bf16.msra.mxu0 0
        %1568 = vmatprep.subr.bf16.mxu0 0
        %1569 = vmatpush1.bf16.msra.mxu0 0
        %1570 = vmatprep.subr.bf16.mxu0 0
        %1571 = vmatpush1.bf16.msra.mxu0 0
        %1572 = vmatprep.subr.bf16.mxu0 0
        %1573 = vmatpush1.bf16.msra.mxu0 0
        %1574 = vmatprep.mubr.bf16.mxu0 0
        %1575 = vmatmul.mubr.bf16.gmra.mrb[0].mxu0 %v1536
        %v1576 = vpop.f32.mrb[0].mxu0
        %v1577 = vadd.f32 0.0, %v1576
        %v1578 = vpop.f32.mrb[0].mxu0
        %v1579 = vpop.f32.mrb[0].mxu0
        %v1580 = vadd.f32 0.0, %v1579
        %v1581 = vpop.f32.mrb[0].mxu0
        %1582 = vdwg.mxu0
        %v1583 = vmul.f32 %v1577, %v1351
        %v1584 = vmul.f32 %v1580, %v1352
        %v1585 = vld [vmem:[#allocation3] sm:$0xff]
        %v1586 = vld [vmem:[#allocation3 + $0x8] sm:$0xff]
        %v1587 = vadd.f32 %v1585, %v1583
        %v1588 = vadd.f32 %v1586, %v1584
        %1589 = vst [vmem:[#allocation3] sm:$0xff] %v1587
        %1590 = vst [vmem:[#allocation3 + $0x8] sm:$0xff] %v1588
        %1591 = vst [vmem:[#allocation2] sm:$0xff] %v1351
        %1592 = vst [vmem:[#allocation2 + $0x8] sm:$0xff] %v1352
        %v1593 = vsub.f32 1.0, %v1521
        %v1594 = vmul.f32 %v931, %v1593
        %1595 = vst.msk [vmem:[#allocation5] sm:$0x3] %vm119, %v1594
        %v1596 = vsel %vm119, %v1594, -inf
        %1597 = vmax.xlane.f32.xlu0 %v1596
        %v1598 = vpop.xlane.xlu0 %1597
        %v1599 = vrot.slane %v1598, 4
        %v1600 = vmax.f32 %v1598, %v1599
        %v1601 = vrot.slane %v1600, 2
        %v1602 = vmax.f32 %v1600, %v1601
        %v1603 = vrot.slane %v1602, 1
        %v1604 = vmax.f32 %v1602, %v1603
        %s1605 = vtos %v1604
        %p1606 = scmp.gt.f32.partialorder %s1605, 1e-07
        %s1607 = scalar_select %p1606, 1, 0
        %1608 = sst [smem:[%s125]] %s1607
      $region93: #{tpu_custom_call.1} parent=88 // pred_fallthru
        _
      %p1609 = scmp.eq.s32.totalorder %s923, 0
      // Predicated region
      $region94: #{tpu_custom_call.1} parent=88 // pred_check
        %p1610 = pneg %p1609
      $region95: #{tpu_custom_call.1} parent=88 // pred_check_branch
        %1612 = sbr.rel (%p1610) target = $region97
      $region96: #{tpu_custom_call.1} parent=88 // pred_region
        %1613 = sst [smem:[%s123]] 1
      $region97: #{tpu_custom_call.1} parent=88 // pred_fallthru
        _
    $region89: #{tpu_custom_call.1} parent=1 // pred_fallthru
      _
    %s1614 = sld [smem:[#allocation6]]
    %p1615 = scmp.eq.s32.totalorder %s1614, 0
    // Predicated region
    $region98: #{tpu_custom_call.1} parent=1 // pred_check
      %p1616 = pneg %p1615
    $region99: #{tpu_custom_call.1} parent=1 // pred_check_branch
      %1618 = sbr.rel (%p1616) target = $region101
    $region100: #{tpu_custom_call.1} parent=1 // pred_region
      %1619 = sst [smem:[%s121]] 2
      %s1620 = sld [smem:[#allocation6 + $0x1]]
      %p1621 = scmp.eq.s32.totalorder %s1620, 1
      // Predicated region
      $region102: #{tpu_custom_call.1} parent=100 // pred_check
        %p1622 = pneg %p1621
      $region103: #{tpu_custom_call.1} parent=100 // pred_check_branch
        %1624 = sbr.rel (%p1622) target = $region105
      $region104: #{tpu_custom_call.1} parent=100 // pred_region
        %v1625 = vld [vmem:[#allocation2] sm:$0xff]
        %v1626 = vld [vmem:[#allocation2 + $0x8] sm:$0xff]
        %v1627 = vpack.c.bf16 %v1626, %v1625
        %v1628 = vld [vmem:[#allocation5] sm:$0x3]
        %v1633 = vunpack.c.l.b16 %v127
        %v1634 = vunpack.c.l.b16 %v128
        %v1635 = vunpack.c.l.b16 %v129
        %v1636 = vunpack.c.l.b16 %v130
        %v1637 = vpack.c.b16 %v1634, %v1633
        %v1638 = vpack.c.b16 %v1636, %v1635
        %vm1639 = vcmask 130048
        %v1641 = vsel %vm1639, %v1637, 0
        %v1644 = vsel %vm1639, %v1638, 0
        %1646 = vmatprep.subr.bf16.mxu0 0
        %1647 = vmatpush1.bf16.msra.mxu0 %v1627
        %1648 = vmatprep.subr.bf16.mxu0 0
        %1649 = vmatpush1.bf16.msra.mxu0 0
        %1650 = vmatprep.subr.bf16.mxu0 0
        %1651 = vmatpush1.bf16.msra.mxu0 0
        %1652 = vmatprep.subr.bf16.mxu0 0
        %1653 = vmatpush1.bf16.msra.mxu0 0
        %1654 = vmatprep.subr.bf16.mxu0 0
        %1655 = vmatpush1.bf16.msra.mxu0 0
        %1656 = vmatprep.subr.bf16.mxu0 0
        %1657 = vmatpush1.bf16.msra.mxu0 0
        %1658 = vmatprep.subr.bf16.mxu0 0
        %1659 = vmatpush1.bf16.msra.mxu0 0
        %1660 = vmatprep.subr.bf16.mxu0 0
        %1661 = vmatpush1.bf16.msra.mxu0 0
        %1662 = vmatprep.subr.bf16.mxu0 0
        %1663 = vmatpush1.bf16.msra.mxu0 0
        %1664 = vmatprep.subr.bf16.mxu0 0
        %1665 = vmatpush1.bf16.msra.mxu0 0
        %1666 = vmatprep.subr.bf16.mxu0 0
        %1667 = vmatpush1.bf16.msra.mxu0 0
        %1668 = vmatprep.subr.bf16.mxu0 0
        %1669 = vmatpush1.bf16.msra.mxu0 0
        %1670 = vmatprep.subr.bf16.mxu0 0
        %1671 = vmatpush1.bf16.msra.mxu0 0
        %1672 = vmatprep.subr.bf16.mxu0 0
        %1673 = vmatpush1.bf16.msra.mxu0 0
        %1674 = vmatprep.subr.bf16.mxu0 0
        %1675 = vmatpush1.bf16.msra.mxu0 0
        %1676 = vmatprep.subr.bf16.mxu0 0
        %1677 = vmatpush1.bf16.msra.mxu0 0
        %1678 = vmatprep.mubr.bf16.mxu0 0
        %1679 = vmatmul.mubr.bf16.gmra.mrb[0].mxu0 %v1641
        %v1680 = vpop.f32.mrb[0].mxu0
        %v1681 = vadd.f32 0.0, %v1680
        %v1682 = vpop.f32.mrb[0].mxu0
        %v1683 = vpop.f32.mrb[0].mxu0
        %v1684 = vadd.f32 0.0, %v1683
        %v1685 = vpop.f32.mrb[0].mxu0
        %1686 = vmatprep.mubr.bf16.mxu0 0
        %1687 = vmatmul.mubr.bf16.gmra.mrb[0].mxu0 %v1644
        %v1688 = vpop.f32.mrb[0].mxu0
        %v1689 = vadd.f32 0.0, %v1688
        %v1690 = vpop.f32.mrb[0].mxu0
        %v1691 = vpop.f32.mrb[0].mxu0
        %v1692 = vadd.f32 0.0, %v1691
        %v1693 = vpop.f32.mrb[0].mxu0
        %1694 = vdwg.mxu0
        %v1695 = vpack.c.bf16 %v1684, %v1681
        %v1696 = vpack.c.bf16 %v1692, %v1689
        %v1698 = vlaneseq
        %v1699 = vshrl.u32 %v1698, 7
        %v1700 = vsub.s32 0, %v1699
        %v1701 = vrot.slane %v169, %v1700
        %v1735 = vunpack.c.l.b16 %v137
        %v1736 = vunpack.c.l.b16 %v138
        %v1737 = vunpack.c.l.b16 %v139
        %v1738 = vunpack.c.l.b16 %v140
        %v1739 = vunpack.c.l.b16 %v141
        %v1740 = vunpack.c.l.b16 %v142
        %v1741 = vunpack.c.l.b16 %v143
        %v1742 = vunpack.c.l.b16 %v144
        %v1743 = vunpack.c.l.b16 %v145
        %v1744 = vunpack.c.l.b16 %v146
        %v1745 = vunpack.c.l.b16 %v147
        %v1746 = vunpack.c.l.b16 %v148
        %v1747 = vunpack.c.l.b16 %v149
        %v1748 = vunpack.c.l.b16 %v150
        %v1749 = vunpack.c.l.b16 %v151
        %v1750 = vunpack.c.l.b16 %v152
        %v1751 = vunpack.c.l.b16 %v153
        %v1752 = vunpack.c.l.b16 %v154
        %v1753 = vunpack.c.l.b16 %v155
        %v1754 = vunpack.c.l.b16 %v156
        %v1755 = vunpack.c.l.b16 %v157
        %v1756 = vunpack.c.l.b16 %v158
        %v1757 = vunpack.c.l.b16 %v159
        %v1758 = vunpack.c.l.b16 %v160
        %v1759 = vunpack.c.l.b16 %v161
        %v1760 = vunpack.c.l.b16 %v162
        %v1761 = vunpack.c.l.b16 %v163
        %v1762 = vunpack.c.l.b16 %v164
        %v1763 = vunpack.c.l.b16 %v165
        %v1764 = vunpack.c.l.b16 %v166
        %v1765 = vunpack.c.l.b16 %v167
        %v1766 = vunpack.c.l.b16 %v168
        %v1767 = vpack.c.b16 %v1736, %v1735
        %v1768 = vpack.c.b16 %v1738, %v1737
        %v1769 = vpack.c.b16 %v1740, %v1739
        %v1770 = vpack.c.b16 %v1742, %v1741
        %v1771 = vpack.c.b16 %v1744, %v1743
        %v1772 = vpack.c.b16 %v1746, %v1745
        %v1773 = vpack.c.b16 %v1748, %v1747
        %v1774 = vpack.c.b16 %v1750, %v1749
        %v1775 = vpack.c.b16 %v1752, %v1751
        %v1776 = vpack.c.b16 %v1754, %v1753
        %v1777 = vpack.c.b16 %v1756, %v1755
        %v1778 = vpack.c.b16 %v1758, %v1757
        %v1779 = vpack.c.b16 %v1760, %v1759
        %v1780 = vpack.c.b16 %v1762, %v1761
        %v1781 = vpack.c.b16 %v1764, %v1763
        %v1782 = vpack.c.b16 %v1766, %v1765
        %1799 = vmatprep.subr.bf16.mxu0 0
        %1800 = vmatpush1.bf16.msra.mxu0 %v1767
        %1801 = vmatprep.subr.bf16.mxu0 0
        %1802 = vmatpush1.bf16.msra.mxu0 %v1768
        %1803 = vmatprep.subr.bf16.mxu0 0
        %1804 = vmatpush1.bf16.msra.mxu0 %v1769
        %1805 = vmatprep.subr.bf16.mxu0 0
        %1806 = vmatpush1.bf16.msra.mxu0 %v1770
        %1807 = vmatprep.subr.bf16.mxu0 0
        %1808 = vmatpush1.bf16.msra.mxu0 %v1771
        %1809 = vmatprep.subr.bf16.mxu0 0
        %1810 = vmatpush1.bf16.msra.mxu0 %v1772
        %1811 = vmatprep.subr.bf16.mxu0 0
        %1812 = vmatpush1.bf16.msra.mxu0 %v1773
        %1813 = vmatprep.subr.bf16.mxu0 0
        %1814 = vmatpush1.bf16.msra.mxu0 %v1774
        %1815 = vmatprep.subr.bf16.mxu0 0
        %1816 = vmatpush1.bf16.msra.mxu0 %v1775
        %1817 = vmatprep.subr.bf16.mxu0 0
        %1818 = vmatpush1.bf16.msra.mxu0 %v1776
        %1819 = vmatprep.subr.bf16.mxu0 0
        %1820 = vmatpush1.bf16.msra.mxu0 %v1777
        %1821 = vmatprep.subr.bf16.mxu0 0
        %1822 = vmatpush1.bf16.msra.mxu0 %v1778
        %1823 = vmatprep.subr.bf16.mxu0 0
        %1824 = vmatpush1.bf16.msra.mxu0 %v1779
        %1825 = vmatprep.subr.bf16.mxu0 0
        %1826 = vmatpush1.bf16.msra.mxu0 %v1780
        %1827 = vmatprep.subr.bf16.mxu0 0
        %1828 = vmatpush1.bf16.msra.mxu0 %v1781
        %1829 = vmatprep.subr.bf16.mxu0 0
        %1830 = vmatpush1.bf16.msra.mxu0 %v1782
        %1831 = vmatprep.mubr.bf16.mxu0 %v222
        %1832 = vmatmul.mubr.bf16.gmra.mrb[0].mxu0 %v1695
        %v1833 = vpop.f32.mrb[0].mxu0
        %v1834 = vadd.f32 %v1701, %v1833
        %v1835 = vpop.f32.mrb[0].mxu0
        %v1836 = vpop.f32.mrb[0].mxu0
        %v1837 = vadd.f32 %v1701, %v1836
        %v1838 = vpop.f32.mrb[0].mxu0
        %1839 = vmatprep.mubr.bf16.mxu0 %v223
        %1840 = vmatmul.mubr.bf16.gmra.mrb[0].mxu0 %v1696
        %v1841 = vpop.f32.mrb[0].mxu0
        %v1842 = vadd.f32 %v1701, %v1841
        %v1843 = vpop.f32.mrb[0].mxu0
        %v1844 = vpop.f32.mrb[0].mxu0
        %v1845 = vadd.f32 %v1701, %v1844
        %v1846 = vpop.f32.mrb[0].mxu0
        %1847 = vdwg.mxu0
        %v1848 = vmax.f32 %v1834, 0.0
        %v1849 = vmax.f32 %v1837, 0.0
        %v1850 = vmax.f32 %v1842, 0.0
        %v1851 = vmax.f32 %v1845, 0.0
        %v1852 = vpack.c.bf16 %v1849, %v1848
        %v1853 = vpack.c.bf16 %v1851, %v1850
        %v1856 = vunpack.c.l.b16 %v131
        %v1857 = vunpack.c.l.b16 %v132
        %v1858 = vpack.c.b16 %v1857, %v1856
        %vm1859 = vcmask 261120
        %v1861 = vsel %vm1859, %v1858, 0
        %1863 = vmatprep.subr.bf16.mxu0 0
        %1864 = vmatpush1.bf16.msra.mxu0 %v1852
        %1865 = vmatprep.subr.bf16.mxu0 0
        %1866 = vmatpush1.bf16.msra.mxu0 %v1853
        %1867 = vmatprep.subr.bf16.mxu0 0
        %1868 = vmatpush1.bf16.msra.mxu0 0
        %1869 = vmatprep.subr.bf16.mxu0 0
        %1870 = vmatpush1.bf16.msra.mxu0 0
        %1871 = vmatprep.subr.bf16.mxu0 0
        %1872 = vmatpush1.bf16.msra.mxu0 0
        %1873 = vmatprep.subr.bf16.mxu0 0
        %1874 = vmatpush1.bf16.msra.mxu0 0
        %1875 = vmatprep.subr.bf16.mxu0 0
        %1876 = vmatpush1.bf16.msra.mxu0 0
        %1877 = vmatprep.subr.bf16.mxu0 0
        %1878 = vmatpush1.bf16.msra.mxu0 0
        %1879 = vmatprep.subr.bf16.mxu0 0
        %1880 = vmatpush1.bf16.msra.mxu0 0
        %1881 = vmatprep.subr.bf16.mxu0 0
        %1882 = vmatpush1.bf16.msra.mxu0 0
        %1883 = vmatprep.subr.bf16.mxu0 0
        %1884 = vmatpush1.bf16.msra.mxu0 0
        %1885 = vmatprep.subr.bf16.mxu0 0
        %1886 = vmatpush1.bf16.msra.mxu0 0
        %1887 = vmatprep.subr.bf16.mxu0 0
        %1888 = vmatpush1.bf16.msra.mxu0 0
        %1889 = vmatprep.subr.bf16.mxu0 0
        %1890 = vmatpush1.bf16.msra.mxu0 0
        %1891 = vmatprep.subr.bf16.mxu0 0
        %1892 = vmatpush1.bf16.msra.mxu0 0
        %1893 = vmatprep.subr.bf16.mxu0 0
        %1894 = vmatpush1.bf16.msra.mxu0 0
        %1895 = vmatprep.mubr.bf16.mxu0 0
        %1896 = vmatmul.mubr.bf16.gmra.mrb[0].mxu0 %v1861
        %v1897 = vpop.f32.mrb[0].mxu0
        %v1898 = vadd.f32 0.0, %v1897
        %v1899 = vpop.f32.mrb[0].mxu0
        %v1900 = vpop.f32.mrb[0].mxu0
        %v1901 = vadd.f32 0.0, %v1900
        %v1902 = vpop.f32.mrb[0].mxu0
        %1903 = vdwg.mxu0
        %v1904 = vpack.c.bf16 %v1901, %v1898
        %v1906 = vlaneseq
        %v1907 = vshrl.u32 %v1906, 7
        %v1908 = vsub.s32 0, %v1907
        %v1909 = vrot.slane %v202, %v1908
        %v1943 = vunpack.c.l.b16 %v170
        %v1944 = vunpack.c.l.b16 %v171
        %v1945 = vunpack.c.l.b16 %v172
        %v1946 = vunpack.c.l.b16 %v173
        %v1947 = vunpack.c.l.b16 %v174
        %v1948 = vunpack.c.l.b16 %v175
        %v1949 = vunpack.c.l.b16 %v176
        %v1950 = vunpack.c.l.b16 %v177
        %v1951 = vunpack.c.l.b16 %v178
        %v1952 = vunpack.c.l.b16 %v179
        %v1953 = vunpack.c.l.b16 %v180
        %v1954 = vunpack.c.l.b16 %v181
        %v1955 = vunpack.c.l.b16 %v182
        %v1956 = vunpack.c.l.b16 %v183
        %v1957 = vunpack.c.l.b16 %v184
        %v1958 = vunpack.c.l.b16 %v185
        %v1959 = vunpack.c.l.b16 %v186
        %v1960 = vunpack.c.l.b16 %v187
        %v1961 = vunpack.c.l.b16 %v188
        %v1962 = vunpack.c.l.b16 %v189
        %v1963 = vunpack.c.l.b16 %v190
        %v1964 = vunpack.c.l.b16 %v191
        %v1965 = vunpack.c.l.b16 %v192
        %v1966 = vunpack.c.l.b16 %v193
        %v1967 = vunpack.c.l.b16 %v194
        %v1968 = vunpack.c.l.b16 %v195
        %v1969 = vunpack.c.l.b16 %v196
        %v1970 = vunpack.c.l.b16 %v197
        %v1971 = vunpack.c.l.b16 %v198
        %v1972 = vunpack.c.l.b16 %v199
        %v1973 = vunpack.c.l.b16 %v200
        %v1974 = vunpack.c.l.b16 %v201
        %v1975 = vpack.c.b16 %v1944, %v1943
        %v1976 = vpack.c.b16 %v1946, %v1945
        %v1977 = vpack.c.b16 %v1948, %v1947
        %v1978 = vpack.c.b16 %v1950, %v1949
        %v1979 = vpack.c.b16 %v1952, %v1951
        %v1980 = vpack.c.b16 %v1954, %v1953
        %v1981 = vpack.c.b16 %v1956, %v1955
        %v1982 = vpack.c.b16 %v1958, %v1957
        %v1983 = vpack.c.b16 %v1960, %v1959
        %v1984 = vpack.c.b16 %v1962, %v1961
        %v1985 = vpack.c.b16 %v1964, %v1963
        %v1986 = vpack.c.b16 %v1966, %v1965
        %v1987 = vpack.c.b16 %v1968, %v1967
        %v1988 = vpack.c.b16 %v1970, %v1969
        %v1989 = vpack.c.b16 %v1972, %v1971
        %v1990 = vpack.c.b16 %v1974, %v1973
        %2007 = vmatprep.subr.bf16.mxu0 0
        %2008 = vmatpush1.bf16.msra.mxu0 %v1975
        %2009 = vmatprep.subr.bf16.mxu0 0
        %2010 = vmatpush1.bf16.msra.mxu0 %v1976
        %2011 = vmatprep.subr.bf16.mxu0 0
        %2012 = vmatpush1.bf16.msra.mxu0 %v1977
        %2013 = vmatprep.subr.bf16.mxu0 0
        %2014 = vmatpush1.bf16.msra.mxu0 %v1978
        %2015 = vmatprep.subr.bf16.mxu0 0
        %2016 = vmatpush1.bf16.msra.mxu0 %v1979
        %2017 = vmatprep.subr.bf16.mxu0 0
        %2018 = vmatpush1.bf16.msra.mxu0 %v1980
        %2019 = vmatprep.subr.bf16.mxu0 0
        %2020 = vmatpush1.bf16.msra.mxu0 %v1981
        %2021 = vmatprep.subr.bf16.mxu0 0
        %2022 = vmatpush1.bf16.msra.mxu0 %v1982
        %2023 = vmatprep.subr.bf16.mxu0 0
        %2024 = vmatpush1.bf16.msra.mxu0 %v1983
        %2025 = vmatprep.subr.bf16.mxu0 0
        %2026 = vmatpush1.bf16.msra.mxu0 %v1984
        %2027 = vmatprep.subr.bf16.mxu0 0
        %2028 = vmatpush1.bf16.msra.mxu0 %v1985
        %2029 = vmatprep.subr.bf16.mxu0 0
        %2030 = vmatpush1.bf16.msra.mxu0 %v1986
        %2031 = vmatprep.subr.bf16.mxu0 0
        %2032 = vmatpush1.bf16.msra.mxu0 %v1987
        %2033 = vmatprep.subr.bf16.mxu0 0
        %2034 = vmatpush1.bf16.msra.mxu0 %v1988
        %2035 = vmatprep.subr.bf16.mxu0 0
        %2036 = vmatpush1.bf16.msra.mxu0 %v1989
        %2037 = vmatprep.subr.bf16.mxu0 0
        %2038 = vmatpush1.bf16.msra.mxu0 %v1990
        %2039 = vmatprep.mubr.bf16.mxu0 %v1904
        %2040 = vmatmul.mubr.bf16.gmra.mrb[0].mxu0 %v1627
        %v2041 = vpop.f32.mrb[0].mxu0
        %v2042 = vadd.f32 %v1909, %v2041
        %v2043 = vpop.f32.mrb[0].mxu0
        %v2044 = vpop.f32.mrb[0].mxu0
        %v2045 = vadd.f32 %v1909, %v2044
        %v2046 = vpop.f32.mrb[0].mxu0
        %2047 = vdwg.mxu0
        %v2048 = vmax.f32 %v2042, 0.0
        %v2049 = vmax.f32 %v2045, 0.0
        %v2051 = vsel %vm1639, %v133, 0
        %2053 = vmatprep.subr.bf16.mxu0 0
        %2054 = vmatpush1.bf16.msra.mxu0 %v1627
        %2055 = vmatprep.subr.bf16.mxu0 0
        %2056 = vmatpush1.bf16.msra.mxu0 0
        %2057 = vmatprep.subr.bf16.mxu0 0
        %2058 = vmatpush1.bf16.msra.mxu0 0
        %2059 = vmatprep.subr.bf16.mxu0 0
        %2060 = vmatpush1.bf16.msra.mxu0 0
        %2061 = vmatprep.subr.bf16.mxu0 0
        %2062 = vmatpush1.bf16.msra.mxu0 0
        %2063 = vmatprep.subr.bf16.mxu0 0
        %2064 = vmatpush1.bf16.msra.mxu0 0
        %2065 = vmatprep.subr.bf16.mxu0 0
        %2066 = vmatpush1.bf16.msra.mxu0 0
        %2067 = vmatprep.subr.bf16.mxu0 0
        %2068 = vmatpush1.bf16.msra.mxu0 0
        %2069 = vmatprep.subr.bf16.mxu0 0
        %2070 = vmatpush1.bf16.msra.mxu0 0
        %2071 = vmatprep.subr.bf16.mxu0 0
        %2072 = vmatpush1.bf16.msra.mxu0 0
        %2073 = vmatprep.subr.bf16.mxu0 0
        %2074 = vmatpush1.bf16.msra.mxu0 0
        %2075 = vmatprep.subr.bf16.mxu0 0
        %2076 = vmatpush1.bf16.msra.mxu0 0
        %2077 = vmatprep.subr.bf16.mxu0 0
        %2078 = vmatpush1.bf16.msra.mxu0 0
        %2079 = vmatprep.subr.bf16.mxu0 0
        %2080 = vmatpush1.bf16.msra.mxu0 0
        %2081 = vmatprep.subr.bf16.mxu0 0
        %2082 = vmatpush1.bf16.msra.mxu0 0
        %2083 = vmatprep.subr.bf16.mxu0 0
        %2084 = vmatpush1.bf16.msra.mxu0 0
        %2085 = vmatprep.mubr.bf16.mxu0 0
        %2086 = vmatmul.mubr.bf16.gmra.mrb[0].mxu0 %v2051
        %v2087 = vpop.f32.mrb[0].mxu0
        %v2088 = vadd.f32 0.0, %v2087
        %v2089 = vpop.f32.mrb[0].mxu0
        %v2090 = vpop.f32.mrb[0].mxu0
        %v2091 = vpop.f32.mrb[0].mxu0
        %2092 = vdwg.mxu0
        %2094 = vset.pattern.permute.xlu0 0
        %2095 = vperm.xlu0 %2094, %v136
        %v2096 = vpop.permute.xlu0 %2095
        %v2098 = vmul.f32 %v2088, %v2096
        %v2099 = vpack.c.bf16 %v2098, %v2098
        %v2101 = vlaneseq
        %v2102 = vshrl.u32 %v2101, 7
        %v2103 = vsub.s32 0, %v2102
        %v2104 = vrot.slane %v219, %v2103
        %v2122 = vunpack.c.l.b16 %v203
        %v2123 = vunpack.c.l.b16 %v204
        %v2124 = vunpack.c.l.b16 %v205
        %v2125 = vunpack.c.l.b16 %v206
        %v2126 = vunpack.c.l.b16 %v207
        %v2127 = vunpack.c.l.b16 %v208
        %v2128 = vunpack.c.l.b16 %v209
        %v2129 = vunpack.c.l.b16 %v210
        %v2130 = vunpack.c.l.b16 %v211
        %v2131 = vunpack.c.l.b16 %v212
        %v2132 = vunpack.c.l.b16 %v213
        %v2133 = vunpack.c.l.b16 %v214
        %v2134 = vunpack.c.l.b16 %v215
        %v2135 = vunpack.c.l.b16 %v216
        %v2136 = vunpack.c.l.b16 %v217
        %v2137 = vunpack.c.l.b16 %v218
        %v2138 = vpack.c.b16 %v2123, %v2122
        %v2139 = vpack.c.b16 %v2125, %v2124
        %v2140 = vpack.c.b16 %v2127, %v2126
        %v2141 = vpack.c.b16 %v2129, %v2128
        %v2142 = vpack.c.b16 %v2131, %v2130
        %v2143 = vpack.c.b16 %v2133, %v2132
        %v2144 = vpack.c.b16 %v2135, %v2134
        %v2145 = vpack.c.b16 %v2137, %v2136
        %2154 = vmatprep.subr.bf16.mxu0 0
        %2155 = vmatpush1.bf16.msra.mxu0 %v2138
        %2156 = vmatprep.subr.bf16.mxu0 0
        %2157 = vmatpush1.bf16.msra.mxu0 %v2139
        %2158 = vmatprep.subr.bf16.mxu0 0
        %2159 = vmatpush1.bf16.msra.mxu0 %v2140
        %2160 = vmatprep.subr.bf16.mxu0 0
        %2161 = vmatpush1.bf16.msra.mxu0 %v2141
        %2162 = vmatprep.subr.bf16.mxu0 0
        %2163 = vmatpush1.bf16.msra.mxu0 %v2142
        %2164 = vmatprep.subr.bf16.mxu0 0
        %2165 = vmatpush1.bf16.msra.mxu0 %v2143
        %2166 = vmatprep.subr.bf16.mxu0 0
        %2167 = vmatpush1.bf16.msra.mxu0 %v2144
        %2168 = vmatprep.subr.bf16.mxu0 0
        %2169 = vmatpush1.bf16.msra.mxu0 %v2145
        %2170 = vmatprep.subr.bf16.mxu0 0
        %2171 = vmatpush1.bf16.msra.mxu0 0
        %2172 = vmatprep.subr.bf16.mxu0 0
        %2173 = vmatpush1.bf16.msra.mxu0 0
        %2174 = vmatprep.subr.bf16.mxu0 0
        %2175 = vmatpush1.bf16.msra.mxu0 0
        %2176 = vmatprep.subr.bf16.mxu0 0
        %2177 = vmatpush1.bf16.msra.mxu0 0
        %2178 = vmatprep.subr.bf16.mxu0 0
        %2179 = vmatpush1.bf16.msra.mxu0 0
        %2180 = vmatprep.subr.bf16.mxu0 0
        %2181 = vmatpush1.bf16.msra.mxu0 0
        %2182 = vmatprep.subr.bf16.mxu0 0
        %2183 = vmatpush1.bf16.msra.mxu0 0
        %2184 = vmatprep.subr.bf16.mxu0 0
        %2185 = vmatpush1.bf16.msra.mxu0 0
        %2186 = vmatprep.mubr.bf16.mxu0 0
        %2187 = vmatmul.mubr.bf16.gmra.mrb[0].mxu0 %v2099
        %v2188 = vpop.f32.mrb[0].mxu0
        %v2189 = vadd.f32 %v2104, %v2188
        %v2190 = vpop.f32.mrb[0].mxu0
        %v2191 = vpop.f32.mrb[0].mxu0
        %v2192 = vpop.f32.mrb[0].mxu0
        %2193 = vdwg.mxu0
        %v2194 = vmax.f32 %v2189, 0.0
        %v2196 = vlaneseq
        %v2197 = vshrl.u32 %v2196, 7
        %v2198 = vsub.s32 0, %v2197
        %v2199 = vrot.slane %v220, %v2198
        %v2201 = vmul.f32 %v2194, %v2199
        %vm2202 = vcmask 1041408
        %v2203 = vsel %vm2202, %v2201, 0.0
        %2204 = vadd.xlane.f32.xlu0 %v2203
        %v2205 = vpop.xlane.xlu0 %2204
        %v2207 = vlaneseq
        %v2208 = vshrl.u32 %v2207, 7
        %v2209 = vsub.s32 0, %v2208
        %v2210 = vrot.slane %v221, %v2209
        %v2212 = vadd.f32 %v2205, %v2210
        %v2213 = vxor.u32 %v2212, 2147483648
        %v2214 = vmul.f32 %v2213, 1.442695
        %v2215 = vpow.pop %v2214
        %v2216 = vadd.f32 %v2215, 1.0
        %v2217 = vrcp.pop %v2216
        %v2218 = vmul.f32 1.0, %v2217
        %v2219 = vmul.f32 %v1628, %v2218
        %2221 = vset.pattern.permute.xlu0 0
        %2222 = vperm.xlu0 %2221, %v2219
        %v2223 = vpop.permute.xlu0 %2222
        %v2225 = vpack.c.bf16 %v2223, %v2223
        %v2228 = vunpack.c.l.b16 %v134
        %v2229 = vunpack.c.l.b16 %v135
        %v2230 = vpack.c.b16 %v2229, %v2228
        %vm2231 = vcmask 15360
        %v2233 = vsel %vm2231, %v2230, 0
        %vm2235 = vcmask 1040384
        %v2237 = vsel %vm2235, %v2225, 0
        %2239 = vmatprep.subr.bf16.mxu0 0
        %2240 = vmatpush1.bf16.msra.mxu0 %v2237
        %2241 = vmatprep.subr.bf16.mxu0 0
        %2242 = vmatpush1.bf16.msra.mxu0 0
        %2243 = vmatprep.subr.bf16.mxu0 0
        %2244 = vmatpush1.bf16.msra.mxu0 0
        %2245 = vmatprep.subr.bf16.mxu0 0
        %2246 = vmatpush1.bf16.msra.mxu0 0
        %2247 = vmatprep.subr.bf16.mxu0 0
        %2248 = vmatpush1.bf16.msra.mxu0 0
        %2249 = vmatprep.subr.bf16.mxu0 0
        %2250 = vmatpush1.bf16.msra.mxu0 0
        %2251 = vmatprep.subr.bf16.mxu0 0
        %2252 = vmatpush1.bf16.msra.mxu0 0
        %2253 = vmatprep.subr.bf16.mxu0 0
        %2254 = vmatpush1.bf16.msra.mxu0 0
        %2255 = vmatprep.subr.bf16.mxu0 0
        %2256 = vmatpush1.bf16.msra.mxu0 0
        %2257 = vmatprep.subr.bf16.mxu0 0
        %2258 = vmatpush1.bf16.msra.mxu0 0
        %2259 = vmatprep.subr.bf16.mxu0 0
        %2260 = vmatpush1.bf16.msra.mxu0 0
        %2261 = vmatprep.subr.bf16.mxu0 0
        %2262 = vmatpush1.bf16.msra.mxu0 0
        %2263 = vmatprep.subr.bf16.mxu0 0
        %2264 = vmatpush1.bf16.msra.mxu0 0
        %2265 = vmatprep.subr.bf16.mxu0 0
        %2266 = vmatpush1.bf16.msra.mxu0 0
        %2267 = vmatprep.subr.bf16.mxu0 0
        %2268 = vmatpush1.bf16.msra.mxu0 0
        %2269 = vmatprep.subr.bf16.mxu0 0
        %2270 = vmatpush1.bf16.msra.mxu0 0
        %2271 = vmatprep.mubr.bf16.mxu0 0
        %2272 = vmatmul.mubr.bf16.gmra.mrb[0].mxu0 %v2233
        %v2273 = vpop.f32.mrb[0].mxu0
        %v2274 = vadd.f32 0.0, %v2273
        %v2275 = vpop.f32.mrb[0].mxu0
        %v2276 = vpop.f32.mrb[0].mxu0
        %v2277 = vadd.f32 0.0, %v2276
        %v2278 = vpop.f32.mrb[0].mxu0
        %2279 = vdwg.mxu0
        %v2280 = vmul.f32 %v2274, %v2048
        %v2281 = vmul.f32 %v2277, %v2049
        %v2282 = vld [vmem:[#allocation3] sm:$0xff]
        %v2283 = vld [vmem:[#allocation3 + $0x8] sm:$0xff]
        %v2284 = vadd.f32 %v2282, %v2280
        %v2285 = vadd.f32 %v2283, %v2281
        %2286 = vst [vmem:[#allocation3] sm:$0xff] %v2284
        %2287 = vst [vmem:[#allocation3 + $0x8] sm:$0xff] %v2285
        %2288 = vst [vmem:[#allocation2] sm:$0xff] %v2048
        %2289 = vst [vmem:[#allocation2 + $0x8] sm:$0xff] %v2049
        %v2290 = vsub.f32 1.0, %v2218
        %v2291 = vmul.f32 %v1628, %v2290
        %2292 = vst.msk [vmem:[#allocation5] sm:$0x3] %vm119, %v2291
        %v2293 = vsel %vm119, %v2291, -inf
        %2294 = vmax.xlane.f32.xlu0 %v2293
        %v2295 = vpop.xlane.xlu0 %2294
        %v2296 = vrot.slane %v2295, 4
        %v2297 = vmax.f32 %v2295, %v2296
        %v2298 = vrot.slane %v2297, 2
        %v2299 = vmax.f32 %v2297, %v2298
        %v2300 = vrot.slane %v2299, 1
        %v2301 = vmax.f32 %v2299, %v2300
        %s2302 = vtos %v2301
        %p2303 = scmp.gt.f32.partialorder %s2302, 1e-07
        %s2304 = scalar_select %p2303, 1, 0
        %2305 = sst [smem:[%s125]] %s2304
      $region105: #{tpu_custom_call.1} parent=100 // pred_fallthru
        _
      %p2306 = scmp.eq.s32.totalorder %s1620, 0
      // Predicated region
      $region106: #{tpu_custom_call.1} parent=100 // pred_check
        %p2307 = pneg %p2306
      $region107: #{tpu_custom_call.1} parent=100 // pred_check_branch
        %2309 = sbr.rel (%p2307) target = $region109
      $region108: #{tpu_custom_call.1} parent=100 // pred_region
        %2310 = sst [smem:[%s123]] 1
      $region109: #{tpu_custom_call.1} parent=100 // pred_fallthru
        _
    $region101: #{tpu_custom_call.1} parent=1 // pred_fallthru
      _
    %v2311 = vld [vmem:[#allocation3] sm:$0xff]
    %v2312 = vld [vmem:[#allocation3 + $0x8] sm:$0xff]
    %2313 = vst.msk [vmem:[%s15] sm:$0xff] %vm101, %v2311
    %2314 = vst.msk [vmem:[%s15 + $0x8] sm:$0xff] %vm101, %v2312
    // Predicated region
    $region110: #{tpu_custom_call.1} parent=1 // pred_check
      _
    $region111: #{tpu_custom_call.1} parent=1 // pred_check_branch
      %2316 = sbr.rel (0) target = $region113
    $region112: #{tpu_custom_call.1} parent=1 // pred_region
      _
    $region113: #{tpu_custom_call.1} parent=1 // pred_fallthru
      _
    // Predicated region
    $region114: #{tpu_custom_call.1} parent=1 // pred_check
      _
    $region115: #{tpu_custom_call.1} parent=1 // pred_check_branch
      %2318 = sbr.rel (0) target = $region117
    $region116: #{tpu_custom_call.1} parent=1 // pred_region
      %s2320 = ssub.s32 16, 16
      %2321 = vsyncadd [#allocation10], %s2320
      %2324 = dma.smem_to_hbm [#allocation14], 16, %s16, [#allocation10]
    $region117: #{tpu_custom_call.1} parent=1 // pred_fallthru
      _
    // Predicated region
    $region118: #{tpu_custom_call.1} parent=1 // pred_check
      _
    $region119: #{tpu_custom_call.1} parent=1 // pred_check_branch
      %2326 = sbr.rel (0) target = $region121
    $region120: #{tpu_custom_call.1} parent=1 // pred_region
      _
    $region121: #{tpu_custom_call.1} parent=1 // pred_fallthru
      _
    // Predicated region
    $region122: #{tpu_custom_call.1} parent=1 // pred_check
      _
    $region123: #{tpu_custom_call.1} parent=1 // pred_check_branch
      %2328 = sbr.rel (0) target = $region125
    $region124: #{tpu_custom_call.1} parent=1 // pred_region
      %2329 = dma.done [#allocation10], 16
    $region125: #{tpu_custom_call.1} parent=1 // pred_fallthru
      _
    %2330 = sfence
    %2331 = vsyncpa [#allocation9], 1
    %2332 = vsyncpa [#allocation12], 1
    %2333 = vsyncpa [#allocation10], 1

</llo_original>
